<compile_context>
chip_gen: v7x
topology: tpu7x:2x2x1
jax: 0.10.0
libtpu: 0.0.40
codegen_flags: <defaults>
</compile_context>

<pallas_src>
import jax
import jax.numpy as jnp
from jax import lax
from jax.experimental import pallas as pl
from jax.experimental.pallas import tpu as pltpu  # noqa: F401  (TPU backend)

H = 32   # hidden size
I = 3    # input size


# --------------------------------------------------------------------------- #
# Kernel
# --------------------------------------------------------------------------- #
def _lstm_kernel(xg0_ref,     # (T, Bp, 4H)  precomputed x @ W_ih0 + b0  (gate order [i,f,o,g])
                 w_hh0_ref,   # (H, 4H)      layer-0 recurrent weights
                 w1_ref,      # (2H, 4H)     layer-1 fused [W_ih1; W_hh1]
                 b1_ref,      # (1, 4H)      layer-1 bias (b_ih1 + b_hh1)
                 w_fc_ref,    # (H, 1)
                 b_fc_ref,    # (1, 1)
                 out_ref):    # (Bp, 1)
    T, Bp, _ = xg0_ref.shape

    # Loop-invariant values: load weights once, pre-broadcast the bias once.
    w_hh0 = w_hh0_ref[...]
    w1 = w1_ref[...]
    b1 = jnp.broadcast_to(b1_ref[...], (Bp, 4 * H))

    def gates_to_state(gates, c_prev):
        # gate order [i, f, o, g]: one sigmoid over 3H contiguous lanes,
        # one tanh over the trailing H lanes.
        sig = jax.nn.sigmoid(gates[:, :3 * H])
        i_g = sig[:, 0 * H:1 * H]
        f_g = sig[:, 1 * H:2 * H]
        o_g = sig[:, 2 * H:3 * H]
        g_g = jnp.tanh(gates[:, 3 * H:4 * H])
        c_new = f_g * c_prev + i_g * g_g
        h_new = o_g * jnp.tanh(c_new)
        return h_new, c_new

    def step(t, carry):
        h0, c0, h1, c1 = carry
        # ---- layer 0: input projection already hoisted, only the h-matmul ----
        g0 = xg0_ref[t] + jnp.dot(h0, w_hh0, preferred_element_type=jnp.float32)
        h0, c0 = gates_to_state(g0, c0)
        # ---- layer 1: fused [h0_t, h1_{t-1}] @ [W_ih1; W_hh1] ----
        g1 = jnp.dot(jnp.concatenate([h0, h1], axis=1), w1,
                     preferred_element_type=jnp.float32) + b1
        h1, c1 = gates_to_state(g1, c1)
        return h0, c0, h1, c1

    zeros = jnp.zeros((Bp, H), jnp.float32)
    # Fully unrolled: lets the scheduler overlap layer-0(t+1) with layer-1(t).
    _, _, h1, _ = lax.fori_loop(0, T, step, (zeros, zeros, zeros, zeros),
                                unroll=True)

    # fc(hn[-1]) : last layer's final hidden state -> (Bp, 1)
    out_ref[...] = (jnp.dot(h1, w_fc_ref[...],
                            preferred_element_type=jnp.float32)
                    + b_fc_ref[...])


# --------------------------------------------------------------------------- #
# Wrapper
# --------------------------------------------------------------------------- #
def resource_lstm_forward(x, prepared):
    """x: (B, T, I) float32, batch_first like the PyTorch module."""
    B, T, _ = x.shape
    Bp = ((B + 7) // 8) * 8                     # pad batch to f32 sublane (8)

    x = x.astype(jnp.float32)
    x_tm = jnp.transpose(x, (1, 0, 2))          # (T, B, I) time-major
    x_tm = jnp.pad(x_tm, ((0, 0), (0, Bp - B), (0, 0)))

    # Hoisted layer-0 input projection: one big (T*Bp, 3) @ (3, 128) matmul
    # (lane-dense 128-wide result), bias b0 folded in here.
    xg0 = (x_tm.reshape(T * Bp, I) @ prepared["w_ih0"]
           + prepared["b0"]).reshape(T, Bp, 4 * H)

    out = pl.pallas_call(
        _lstm_kernel,
        out_shape=jax.ShapeDtypeStruct((Bp, 1), jnp.float32),
    )(xg0, prepared["w_hh0"], prepared["w1"], prepared["b1"],
      prepared["w_fc"], prepared["b_fc"])

    return out[:B]                              # drop padded batch rows


# --------------------------------------------------------------------------- #
# Parameters
# --------------------------------------------------------------------------- #
def init_params(key):
    """Raw params, PyTorch layout/semantics: gate order [i, f, g, o],
    weights stored transposed as (in_features, 4H) so x @ W works."""
    bound = 1.0 / jnp.sqrt(jnp.float32(H))
    ks = jax.random.split(key, 12)

    def u(k, shape):
        return jax.random.uniform(k, shape, jnp.float32, -bound, bound)

    return {
        "w_ih0": u(ks[0], (I, 4 * H)),
        "w_hh0": u(ks[1], (H, 4 * H)),
        "b0":    (u(ks[2], (1, 4 * H)) + u(ks[3], (1, 4 * H))),   # b_ih0 + b_hh0
        "w_ih1": u(ks[4], (H, 4 * H)),
        "w_hh1": u(ks[5], (H, 4 * H)),
        "b1":    (u(ks[6], (1, 4 * H)) + u(ks[7], (1, 4 * H))),   # b_ih1 + b_hh1
        "w_fc":  u(ks[8], (H, 1)),
        "b_fc":  u(ks[9], (1, 1)),
    }


def _reorder_gates(w):
    """Permute 4H gate columns from PyTorch [i, f, g, o] to kernel [i, f, o, g]."""
    return jnp.concatenate([w[..., 0:2 * H], w[..., 3 * H:4 * H],
                            w[..., 2 * H:3 * H]], axis=-1)


def prepare_params(raw):
    """One-time prep: gate reorder + layer-1 weight fusion."""
    return {
        "w_ih0": _reorder_gates(raw["w_ih0"]),                      # (I, 4H)
        "b0":    _reorder_gates(raw["b0"]),                         # (1, 4H)
        "w_hh0": _reorder_gates(raw["w_hh0"]),                      # (H, 4H)
        "w1":    jnp.concatenate([_reorder_gates(raw["w_ih1"]),
                                  _reorder_gates(raw["w_hh1"])],
                                 axis=0),                           # (2H, 4H)
        "b1":    _reorder_gates(raw["b1"]),                         # (1, 4H)
        "w_fc":  raw["w_fc"],                                       # (H, 1)
        "b_fc":  raw["b_fc"],                                       # (1, 1)
    }


# --------------------------------------------------------------------------- #
# Pure-JAX reference (torch.nn.LSTM semantics, raw gate order) for validation
# --------------------------------------------------------------------------- #
def reference_forward(x, p):
    B, T, _ = x.shape
    h0 = jnp.zeros((B, H), jnp.float32)
    c0 = jnp.zeros((B, H), jnp.float32)
    h1 = jnp.zeros((B, H), jnp.float32)
    c1 = jnp.zeros((B, H), jnp.float32)

    def cell(x_t, h, c, w_ih, w_hh, b):
        g = x_t @ w_ih + h @ w_hh + b
        i = jax.nn.sigmoid(g[:, 0 * H:1 * H])
        f = jax.nn.sigmoid(g[:, 1 * H:2 * H])
        gg = jnp.tanh(g[:, 2 * H:3 * H])
        o = jax.nn.sigmoid(g[:, 3 * H:4 * H])
        c = f * c + i * gg
        h = o * jnp.tanh(c)
        return h, c

    for t in range(T):
        x_t = x[:, t, :]
        h0, c0 = cell(x_t, h0, c0, p["w_ih0"], p["w_hh0"], p["b0"])
        h1, c1 = cell(h0, h1, c1, p["w_ih1"], p["w_hh1"], p["b1"])
    return h1 @ p["w_fc"] + p["b_fc"]


if __name__ == "__main__":
    key = jax.random.PRNGKey(0)
    k_param, k_x = jax.random.split(key)

    B, T = 2, 8
    raw = init_params(k_param)
    prepared = prepare_params(raw)
    x = jax.random.normal(k_x, (B, T, I), jnp.float32)   # (batch, seq, features)

    out = resource_lstm_forward(x, prepared)
    out = jax.block_until_ready(out)

    ref = reference_forward(x, raw)
    assert out.shape == (B, 1), out.shape
    assert jnp.allclose(out, ref, atol=1e-5, rtol=1e-5), (out, ref)

    print("KERNEL_OK")
</pallas_src>

<mosaic_0001>
module attributes {stable_mosaic.version = 11 : i64} {
  func.func @_lstm_kernel(%arg0: memref<8x8x128xf32, #tpu.memory_space<vmem>>, %arg1: memref<32x128xf32, #tpu.memory_space<vmem>>, %arg2: memref<64x128xf32, #tpu.memory_space<vmem>>, %arg3: memref<1x128xf32, #tpu.memory_space<vmem>>, %arg4: memref<32x1xf32, #tpu.memory_space<vmem>>, %arg5: memref<1x1xf32, #tpu.memory_space<vmem>>, %arg6: memref<8x1xf32, #tpu.memory_space<vmem>>) attributes {dimension_semantics = [], scalar_prefetch = 0 : i64, scratch_operands = 0 : i64, tpu.core_type = #tpu.core_type<tc>} {
    %c0 = arith.constant 0 : index
    %c0_0 = arith.constant 0 : index
    %0 = vector.load %arg1[%c0, %c0_0] : memref<32x128xf32, #tpu.memory_space<vmem>>, vector<32x128xf32>
    %c0_1 = arith.constant 0 : index
    %c0_2 = arith.constant 0 : index
    %1 = vector.load %arg2[%c0_1, %c0_2] : memref<64x128xf32, #tpu.memory_space<vmem>>, vector<64x128xf32>
    %c0_3 = arith.constant 0 : index
    %c0_4 = arith.constant 0 : index
    %2 = vector.load %arg3[%c0_3, %c0_4] : memref<1x128xf32, #tpu.memory_space<vmem>>, vector<1x128xf32>
    %3 = vector.shape_cast %2 : vector<1x128xf32> to vector<1x128xf32>
    %4 = vector.broadcast %3 : vector<1x128xf32> to vector<8x128xf32>
    %cst = arith.constant 0.000000e+00 : f32
    %5 = vector.broadcast %cst : f32 to vector<8x32xf32>
    %c0_i32 = arith.constant 0 : i32
    %6 = arith.index_cast %c0_i32 : i32 to index
    %c0_5 = arith.constant 0 : index
    %c0_6 = arith.constant 0 : index
    %7 = vector.load %arg0[%6, %c0_5, %c0_6] : memref<8x8x128xf32, #tpu.memory_space<vmem>>, vector<1x8x128xf32>
    %8 = vector.shape_cast %7 : vector<1x8x128xf32> to vector<8x128xf32>
    %cst_7 = arith.constant dense<0.000000e+00> : vector<8x128xf32>
    %9 = tpu.matmul %5, %0, %cst_7 {dimension_numbers = #tpu.dot_dimension_numbers<[1], [0], [0], [1], [0, 0, 1, 1], [], []>} : vector<8x32xf32>, vector<32x128xf32>, vector<8x128xf32> -> vector<8x128xf32>
    %10 = arith.addf %8, %9 : vector<8x128xf32>
    %11 = vector.extract_strided_slice %10 {offsets = [0, 0], sizes = [8, 96], strides = [1, 1]} : vector<8x128xf32> to vector<8x96xf32>
    %12 = arith.negf %11 : vector<8x96xf32>
    %13 = math.exp %12 : vector<8x96xf32>
    %cst_8 = arith.constant 1.000000e+00 : f32
    %14 = vector.broadcast %cst_8 : f32 to vector<8x96xf32>
    %15 = arith.addf %14, %13 : vector<8x96xf32>
    %16 = arith.divf %14, %15 : vector<8x96xf32>
    %17 = vector.extract_strided_slice %16 {offsets = [0, 0], sizes = [8, 32], strides = [1, 1]} : vector<8x96xf32> to vector<8x32xf32>
    %18 = vector.extract_strided_slice %16 {offsets = [0, 32], sizes = [8, 32], strides = [1, 1]} : vector<8x96xf32> to vector<8x32xf32>
    %19 = vector.extract_strided_slice %16 {offsets = [0, 64], sizes = [8, 32], strides = [1, 1]} : vector<8x96xf32> to vector<8x32xf32>
    %20 = vector.extract_strided_slice %10 {offsets = [0, 96], sizes = [8, 32], strides = [1, 1]} : vector<8x128xf32> to vector<8x32xf32>
    %21 = math.tanh %20 : vector<8x32xf32>
    %22 = arith.mulf %18, %5 : vector<8x32xf32>
    %23 = arith.mulf %17, %21 : vector<8x32xf32>
    %24 = arith.addf %22, %23 : vector<8x32xf32>
    %25 = math.tanh %24 : vector<8x32xf32>
    %26 = arith.mulf %19, %25 : vector<8x32xf32>
    %27 = tpu.concatenate %26, %5 in 1 : vector<8x32xf32>, vector<8x32xf32> -> vector<8x64xf32>
    %cst_9 = arith.constant dense<0.000000e+00> : vector<8x128xf32>
    %28 = tpu.matmul %27, %1, %cst_9 {dimension_numbers = #tpu.dot_dimension_numbers<[1], [0], [0], [1], [0, 0, 1, 1], [], []>} : vector<8x64xf32>, vector<64x128xf32>, vector<8x128xf32> -> vector<8x128xf32>
    %29 = arith.addf %28, %4 : vector<8x128xf32>
    %30 = vector.extract_strided_slice %29 {offsets = [0, 0], sizes = [8, 96], strides = [1, 1]} : vector<8x128xf32> to vector<8x96xf32>
    %31 = arith.negf %30 : vector<8x96xf32>
    %32 = math.exp %31 : vector<8x96xf32>
    %cst_10 = arith.constant 1.000000e+00 : f32
    %33 = vector.broadcast %cst_10 : f32 to vector<8x96xf32>
    %34 = arith.addf %33, %32 : vector<8x96xf32>
    %35 = arith.divf %33, %34 : vector<8x96xf32>
    %36 = vector.extract_strided_slice %35 {offsets = [0, 0], sizes = [8, 32], strides = [1, 1]} : vector<8x96xf32> to vector<8x32xf32>
    %37 = vector.extract_strided_slice %35 {offsets = [0, 32], sizes = [8, 32], strides = [1, 1]} : vector<8x96xf32> to vector<8x32xf32>
    %38 = vector.extract_strided_slice %35 {offsets = [0, 64], sizes = [8, 32], strides = [1, 1]} : vector<8x96xf32> to vector<8x32xf32>
    %39 = vector.extract_strided_slice %29 {offsets = [0, 96], sizes = [8, 32], strides = [1, 1]} : vector<8x128xf32> to vector<8x32xf32>
    %40 = math.tanh %39 : vector<8x32xf32>
    %41 = arith.mulf %37, %5 : vector<8x32xf32>
    %42 = arith.mulf %36, %40 : vector<8x32xf32>
    %43 = arith.addf %41, %42 : vector<8x32xf32>
    %44 = math.tanh %43 : vector<8x32xf32>
    %45 = arith.mulf %38, %44 : vector<8x32xf32>
    %c1_i32 = arith.constant 1 : i32
    %46 = arith.index_cast %c1_i32 : i32 to index
    %c0_11 = arith.constant 0 : index
    %c0_12 = arith.constant 0 : index
    %47 = vector.load %arg0[%46, %c0_11, %c0_12] : memref<8x8x128xf32, #tpu.memory_space<vmem>>, vector<1x8x128xf32>
    %48 = vector.shape_cast %47 : vector<1x8x128xf32> to vector<8x128xf32>
    %cst_13 = arith.constant dense<0.000000e+00> : vector<8x128xf32>
    %49 = tpu.matmul %26, %0, %cst_13 {dimension_numbers = #tpu.dot_dimension_numbers<[1], [0], [0], [1], [0, 0, 1, 1], [], []>} : vector<8x32xf32>, vector<32x128xf32>, vector<8x128xf32> -> vector<8x128xf32>
    %50 = arith.addf %48, %49 : vector<8x128xf32>
    %51 = vector.extract_strided_slice %50 {offsets = [0, 0], sizes = [8, 96], strides = [1, 1]} : vector<8x128xf32> to vector<8x96xf32>
    %52 = arith.negf %51 : vector<8x96xf32>
    %53 = math.exp %52 : vector<8x96xf32>
    %cst_14 = arith.constant 1.000000e+00 : f32
    %54 = vector.broadcast %cst_14 : f32 to vector<8x96xf32>
    %55 = arith.addf %54, %53 : vector<8x96xf32>
    %56 = arith.divf %54, %55 : vector<8x96xf32>
    %57 = vector.extract_strided_slice %56 {offsets = [0, 0], sizes = [8, 32], strides = [1, 1]} : vector<8x96xf32> to vector<8x32xf32>
    %58 = vector.extract_strided_slice %56 {offsets = [0, 32], sizes = [8, 32], strides = [1, 1]} : vector<8x96xf32> to vector<8x32xf32>
    %59 = vector.extract_strided_slice %56 {offsets = [0, 64], sizes = [8, 32], strides = [1, 1]} : vector<8x96xf32> to vector<8x32xf32>
    %60 = vector.extract_strided_slice %50 {offsets = [0, 96], sizes = [8, 32], strides = [1, 1]} : vector<8x128xf32> to vector<8x32xf32>
    %61 = math.tanh %60 : vector<8x32xf32>
    %62 = arith.mulf %58, %24 : vector<8x32xf32>
    %63 = arith.mulf %57, %61 : vector<8x32xf32>
    %64 = arith.addf %62, %63 : vector<8x32xf32>
    %65 = math.tanh %64 : vector<8x32xf32>
    %66 = arith.mulf %59, %65 : vector<8x32xf32>
    %67 = tpu.concatenate %66, %45 in 1 : vector<8x32xf32>, vector<8x32xf32> -> vector<8x64xf32>
    %cst_15 = arith.constant dense<0.000000e+00> : vector<8x128xf32>
    %68 = tpu.matmul %67, %1, %cst_15 {dimension_numbers = #tpu.dot_dimension_numbers<[1], [0], [0], [1], [0, 0, 1, 1], [], []>} : vector<8x64xf32>, vector<64x128xf32>, vector<8x128xf32> -> vector<8x128xf32>
    %69 = arith.addf %68, %4 : vector<8x128xf32>
    %70 = vector.extract_strided_slice %69 {offsets = [0, 0], sizes = [8, 96], strides = [1, 1]} : vector<8x128xf32> to vector<8x96xf32>
    %71 = arith.negf %70 : vector<8x96xf32>
    %72 = math.exp %71 : vector<8x96xf32>
    %cst_16 = arith.constant 1.000000e+00 : f32
    %73 = vector.broadcast %cst_16 : f32 to vector<8x96xf32>
    %74 = arith.addf %73, %72 : vector<8x96xf32>
    %75 = arith.divf %73, %74 : vector<8x96xf32>
    %76 = vector.extract_strided_slice %75 {offsets = [0, 0], sizes = [8, 32], strides = [1, 1]} : vector<8x96xf32> to vector<8x32xf32>
    %77 = vector.extract_strided_slice %75 {offsets = [0, 32], sizes = [8, 32], strides = [1, 1]} : vector<8x96xf32> to vector<8x32xf32>
    %78 = vector.extract_strided_slice %75 {offsets = [0, 64], sizes = [8, 32], strides = [1, 1]} : vector<8x96xf32> to vector<8x32xf32>
    %79 = vector.extract_strided_slice %69 {offsets = [0, 96], sizes = [8, 32], strides = [1, 1]} : vector<8x128xf32> to vector<8x32xf32>
    %80 = math.tanh %79 : vector<8x32xf32>
    %81 = arith.mulf %77, %43 : vector<8x32xf32>
    %82 = arith.mulf %76, %80 : vector<8x32xf32>
    %83 = arith.addf %81, %82 : vector<8x32xf32>
    %84 = math.tanh %83 : vector<8x32xf32>
    %85 = arith.mulf %78, %84 : vector<8x32xf32>
    %c2_i32 = arith.constant 2 : i32
    %86 = arith.index_cast %c2_i32 : i32 to index
    %c0_17 = arith.constant 0 : index
    %c0_18 = arith.constant 0 : index
    %87 = vector.load %arg0[%86, %c0_17, %c0_18] : memref<8x8x128xf32, #tpu.memory_space<vmem>>, vector<1x8x128xf32>
    %88 = vector.shape_cast %87 : vector<1x8x128xf32> to vector<8x128xf32>
    %cst_19 = arith.constant dense<0.000000e+00> : vector<8x128xf32>
    %89 = tpu.matmul %66, %0, %cst_19 {dimension_numbers = #tpu.dot_dimension_numbers<[1], [0], [0], [1], [0, 0, 1, 1], [], []>} : vector<8x32xf32>, vector<32x128xf32>, vector<8x128xf32> -> vector<8x128xf32>
    %90 = arith.addf %88, %89 : vector<8x128xf32>
    %91 = vector.extract_strided_slice %90 {offsets = [0, 0], sizes = [8, 96], strides = [1, 1]} : vector<8x128xf32> to vector<8x96xf32>
    %92 = arith.negf %91 : vector<8x96xf32>
    %93 = math.exp %92 : vector<8x96xf32>
    %cst_20 = arith.constant 1.000000e+00 : f32
    %94 = vector.broadcast %cst_20 : f32 to vector<8x96xf32>
    %95 = arith.addf %94, %93 : vector<8x96xf32>
    %96 = arith.divf %94, %95 : vector<8x96xf32>
    %97 = vector.extract_strided_slice %96 {offsets = [0, 0], sizes = [8, 32], strides = [1, 1]} : vector<8x96xf32> to vector<8x32xf32>
    %98 = vector.extract_strided_slice %96 {offsets = [0, 32], sizes = [8, 32], strides = [1, 1]} : vector<8x96xf32> to vector<8x32xf32>
    %99 = vector.extract_strided_slice %96 {offsets = [0, 64], sizes = [8, 32], strides = [1, 1]} : vector<8x96xf32> to vector<8x32xf32>
    %100 = vector.extract_strided_slice %90 {offsets = [0, 96], sizes = [8, 32], strides = [1, 1]} : vector<8x128xf32> to vector<8x32xf32>
    %101 = math.tanh %100 : vector<8x32xf32>
    %102 = arith.mulf %98, %64 : vector<8x32xf32>
    %103 = arith.mulf %97, %101 : vector<8x32xf32>
    %104 = arith.addf %102, %103 : vector<8x32xf32>
    %105 = math.tanh %104 : vector<8x32xf32>
    %106 = arith.mulf %99, %105 : vector<8x32xf32>
    %107 = tpu.concatenate %106, %85 in 1 : vector<8x32xf32>, vector<8x32xf32> -> vector<8x64xf32>
    %cst_21 = arith.constant dense<0.000000e+00> : vector<8x128xf32>
    %108 = tpu.matmul %107, %1, %cst_21 {dimension_numbers = #tpu.dot_dimension_numbers<[1], [0], [0], [1], [0, 0, 1, 1], [], []>} : vector<8x64xf32>, vector<64x128xf32>, vector<8x128xf32> -> vector<8x128xf32>
    %109 = arith.addf %108, %4 : vector<8x128xf32>
    %110 = vector.extract_strided_slice %109 {offsets = [0, 0], sizes = [8, 96], strides = [1, 1]} : vector<8x128xf32> to vector<8x96xf32>
    %111 = arith.negf %110 : vector<8x96xf32>
    %112 = math.exp %111 : vector<8x96xf32>
    %cst_22 = arith.constant 1.000000e+00 : f32
    %113 = vector.broadcast %cst_22 : f32 to vector<8x96xf32>
    %114 = arith.addf %113, %112 : vector<8x96xf32>
    %115 = arith.divf %113, %114 : vector<8x96xf32>
    %116 = vector.extract_strided_slice %115 {offsets = [0, 0], sizes = [8, 32], strides = [1, 1]} : vector<8x96xf32> to vector<8x32xf32>
    %117 = vector.extract_strided_slice %115 {offsets = [0, 32], sizes = [8, 32], strides = [1, 1]} : vector<8x96xf32> to vector<8x32xf32>
    %118 = vector.extract_strided_slice %115 {offsets = [0, 64], sizes = [8, 32], strides = [1, 1]} : vector<8x96xf32> to vector<8x32xf32>
    %119 = vector.extract_strided_slice %109 {offsets = [0, 96], sizes = [8, 32], strides = [1, 1]} : vector<8x128xf32> to vector<8x32xf32>
    %120 = math.tanh %119 : vector<8x32xf32>
    %121 = arith.mulf %117, %83 : vector<8x32xf32>
    %122 = arith.mulf %116, %120 : vector<8x32xf32>
    %123 = arith.addf %121, %122 : vector<8x32xf32>
    %124 = math.tanh %123 : vector<8x32xf32>
    %125 = arith.mulf %118, %124 : vector<8x32xf32>
    %c3_i32 = arith.constant 3 : i32
    %126 = arith.index_cast %c3_i32 : i32 to index
    %c0_23 = arith.constant 0 : index
    %c0_24 = arith.constant 0 : index
    %127 = vector.load %arg0[%126, %c0_23, %c0_24] : memref<8x8x128xf32, #tpu.memory_space<vmem>>, vector<1x8x128xf32>
    %128 = vector.shape_cast %127 : vector<1x8x128xf32> to vector<8x128xf32>
    %cst_25 = arith.constant dense<0.000000e+00> : vector<8x128xf32>
    %129 = tpu.matmul %106, %0, %cst_25 {dimension_numbers = #tpu.dot_dimension_numbers<[1], [0], [0], [1], [0, 0, 1, 1], [], []>} : vector<8x32xf32>, vector<32x128xf32>, vector<8x128xf32> -> vector<8x128xf32>
    %130 = arith.addf %128, %129 : vector<8x128xf32>
    %131 = vector.extract_strided_slice %130 {offsets = [0, 0], sizes = [8, 96], strides = [1, 1]} : vector<8x128xf32> to vector<8x96xf32>
    %132 = arith.negf %131 : vector<8x96xf32>
    %133 = math.exp %132 : vector<8x96xf32>
    %cst_26 = arith.constant 1.000000e+00 : f32
    %134 = vector.broadcast %cst_26 : f32 to vector<8x96xf32>
    %135 = arith.addf %134, %133 : vector<8x96xf32>
    %136 = arith.divf %134, %135 : vector<8x96xf32>
    %137 = vector.extract_strided_slice %136 {offsets = [0, 0], sizes = [8, 32], strides = [1, 1]} : vector<8x96xf32> to vector<8x32xf32>
    %138 = vector.extract_strided_slice %136 {offsets = [0, 32], sizes = [8, 32], strides = [1, 1]} : vector<8x96xf32> to vector<8x32xf32>
    %139 = vector.extract_strided_slice %136 {offsets = [0, 64], sizes = [8, 32], strides = [1, 1]} : vector<8x96xf32> to vector<8x32xf32>
    %140 = vector.extract_strided_slice %130 {offsets = [0, 96], sizes = [8, 32], strides = [1, 1]} : vector<8x128xf32> to vector<8x32xf32>
    %141 = math.tanh %140 : vector<8x32xf32>
    %142 = arith.mulf %138, %104 : vector<8x32xf32>
    %143 = arith.mulf %137, %141 : vector<8x32xf32>
    %144 = arith.addf %142, %143 : vector<8x32xf32>
    %145 = math.tanh %144 : vector<8x32xf32>
    %146 = arith.mulf %139, %145 : vector<8x32xf32>
    %147 = tpu.concatenate %146, %125 in 1 : vector<8x32xf32>, vector<8x32xf32> -> vector<8x64xf32>
    %cst_27 = arith.constant dense<0.000000e+00> : vector<8x128xf32>
    %148 = tpu.matmul %147, %1, %cst_27 {dimension_numbers = #tpu.dot_dimension_numbers<[1], [0], [0], [1], [0, 0, 1, 1], [], []>} : vector<8x64xf32>, vector<64x128xf32>, vector<8x128xf32> -> vector<8x128xf32>
    %149 = arith.addf %148, %4 : vector<8x128xf32>
    %150 = vector.extract_strided_slice %149 {offsets = [0, 0], sizes = [8, 96], strides = [1, 1]} : vector<8x128xf32> to vector<8x96xf32>
    %151 = arith.negf %150 : vector<8x96xf32>
    %152 = math.exp %151 : vector<8x96xf32>
    %cst_28 = arith.constant 1.000000e+00 : f32
    %153 = vector.broadcast %cst_28 : f32 to vector<8x96xf32>
    %154 = arith.addf %153, %152 : vector<8x96xf32>
    %155 = arith.divf %153, %154 : vector<8x96xf32>
    %156 = vector.extract_strided_slice %155 {offsets = [0, 0], sizes = [8, 32], strides = [1, 1]} : vector<8x96xf32> to vector<8x32xf32>
    %157 = vector.extract_strided_slice %155 {offsets = [0, 32], sizes = [8, 32], strides = [1, 1]} : vector<8x96xf32> to vector<8x32xf32>
    %158 = vector.extract_strided_slice %155 {offsets = [0, 64], sizes = [8, 32], strides = [1, 1]} : vector<8x96xf32> to vector<8x32xf32>
    %159 = vector.extract_strided_slice %149 {offsets = [0, 96], sizes = [8, 32], strides = [1, 1]} : vector<8x128xf32> to vector<8x32xf32>
    %160 = math.tanh %159 : vector<8x32xf32>
    %161 = arith.mulf %157, %123 : vector<8x32xf32>
    %162 = arith.mulf %156, %160 : vector<8x32xf32>
    %163 = arith.addf %161, %162 : vector<8x32xf32>
    %164 = math.tanh %163 : vector<8x32xf32>
    %165 = arith.mulf %158, %164 : vector<8x32xf32>
    %c4_i32 = arith.constant 4 : i32
    %166 = arith.index_cast %c4_i32 : i32 to index
    %c0_29 = arith.constant 0 : index
    %c0_30 = arith.constant 0 : index
    %167 = vector.load %arg0[%166, %c0_29, %c0_30] : memref<8x8x128xf32, #tpu.memory_space<vmem>>, vector<1x8x128xf32>
    %168 = vector.shape_cast %167 : vector<1x8x128xf32> to vector<8x128xf32>
    %cst_31 = arith.constant dense<0.000000e+00> : vector<8x128xf32>
    %169 = tpu.matmul %146, %0, %cst_31 {dimension_numbers = #tpu.dot_dimension_numbers<[1], [0], [0], [1], [0, 0, 1, 1], [], []>} : vector<8x32xf32>, vector<32x128xf32>, vector<8x128xf32> -> vector<8x128xf32>
    %170 = arith.addf %168, %169 : vector<8x128xf32>
    %171 = vector.extract_strided_slice %170 {offsets = [0, 0], sizes = [8, 96], strides = [1, 1]} : vector<8x128xf32> to vector<8x96xf32>
    %172 = arith.negf %171 : vector<8x96xf32>
    %173 = math.exp %172 : vector<8x96xf32>
    %cst_32 = arith.constant 1.000000e+00 : f32
    %174 = vector.broadcast %cst_32 : f32 to vector<8x96xf32>
    %175 = arith.addf %174, %173 : vector<8x96xf32>
    %176 = arith.divf %174, %175 : vector<8x96xf32>
    %177 = vector.extract_strided_slice %176 {offsets = [0, 0], sizes = [8, 32], strides = [1, 1]} : vector<8x96xf32> to vector<8x32xf32>
    %178 = vector.extract_strided_slice %176 {offsets = [0, 32], sizes = [8, 32], strides = [1, 1]} : vector<8x96xf32> to vector<8x32xf32>
    %179 = vector.extract_strided_slice %176 {offsets = [0, 64], sizes = [8, 32], strides = [1, 1]} : vector<8x96xf32> to vector<8x32xf32>
    %180 = vector.extract_strided_slice %170 {offsets = [0, 96], sizes = [8, 32], strides = [1, 1]} : vector<8x128xf32> to vector<8x32xf32>
    %181 = math.tanh %180 : vector<8x32xf32>
    %182 = arith.mulf %178, %144 : vector<8x32xf32>
    %183 = arith.mulf %177, %181 : vector<8x32xf32>
    %184 = arith.addf %182, %183 : vector<8x32xf32>
    %185 = math.tanh %184 : vector<8x32xf32>
    %186 = arith.mulf %179, %185 : vector<8x32xf32>
    %187 = tpu.concatenate %186, %165 in 1 : vector<8x32xf32>, vector<8x32xf32> -> vector<8x64xf32>
    %cst_33 = arith.constant dense<0.000000e+00> : vector<8x128xf32>
    %188 = tpu.matmul %187, %1, %cst_33 {dimension_numbers = #tpu.dot_dimension_numbers<[1], [0], [0], [1], [0, 0, 1, 1], [], []>} : vector<8x64xf32>, vector<64x128xf32>, vector<8x128xf32> -> vector<8x128xf32>
    %189 = arith.addf %188, %4 : vector<8x128xf32>
    %190 = vector.extract_strided_slice %189 {offsets = [0, 0], sizes = [8, 96], strides = [1, 1]} : vector<8x128xf32> to vector<8x96xf32>
    %191 = arith.negf %190 : vector<8x96xf32>
    %192 = math.exp %191 : vector<8x96xf32>
    %cst_34 = arith.constant 1.000000e+00 : f32
    %193 = vector.broadcast %cst_34 : f32 to vector<8x96xf32>
    %194 = arith.addf %193, %192 : vector<8x96xf32>
    %195 = arith.divf %193, %194 : vector<8x96xf32>
    %196 = vector.extract_strided_slice %195 {offsets = [0, 0], sizes = [8, 32], strides = [1, 1]} : vector<8x96xf32> to vector<8x32xf32>
    %197 = vector.extract_strided_slice %195 {offsets = [0, 32], sizes = [8, 32], strides = [1, 1]} : vector<8x96xf32> to vector<8x32xf32>
    %198 = vector.extract_strided_slice %195 {offsets = [0, 64], sizes = [8, 32], strides = [1, 1]} : vector<8x96xf32> to vector<8x32xf32>
    %199 = vector.extract_strided_slice %189 {offsets = [0, 96], sizes = [8, 32], strides = [1, 1]} : vector<8x128xf32> to vector<8x32xf32>
    %200 = math.tanh %199 : vector<8x32xf32>
    %201 = arith.mulf %197, %163 : vector<8x32xf32>
    %202 = arith.mulf %196, %200 : vector<8x32xf32>
    %203 = arith.addf %201, %202 : vector<8x32xf32>
    %204 = math.tanh %203 : vector<8x32xf32>
    %205 = arith.mulf %198, %204 : vector<8x32xf32>
    %c5_i32 = arith.constant 5 : i32
    %206 = arith.index_cast %c5_i32 : i32 to index
    %c0_35 = arith.constant 0 : index
    %c0_36 = arith.constant 0 : index
    %207 = vector.load %arg0[%206, %c0_35, %c0_36] : memref<8x8x128xf32, #tpu.memory_space<vmem>>, vector<1x8x128xf32>
    %208 = vector.shape_cast %207 : vector<1x8x128xf32> to vector<8x128xf32>
    %cst_37 = arith.constant dense<0.000000e+00> : vector<8x128xf32>
    %209 = tpu.matmul %186, %0, %cst_37 {dimension_numbers = #tpu.dot_dimension_numbers<[1], [0], [0], [1], [0, 0, 1, 1], [], []>} : vector<8x32xf32>, vector<32x128xf32>, vector<8x128xf32> -> vector<8x128xf32>
    %210 = arith.addf %208, %209 : vector<8x128xf32>
    %211 = vector.extract_strided_slice %210 {offsets = [0, 0], sizes = [8, 96], strides = [1, 1]} : vector<8x128xf32> to vector<8x96xf32>
    %212 = arith.negf %211 : vector<8x96xf32>
    %213 = math.exp %212 : vector<8x96xf32>
    %cst_38 = arith.constant 1.000000e+00 : f32
    %214 = vector.broadcast %cst_38 : f32 to vector<8x96xf32>
    %215 = arith.addf %214, %213 : vector<8x96xf32>
    %216 = arith.divf %214, %215 : vector<8x96xf32>
    %217 = vector.extract_strided_slice %216 {offsets = [0, 0], sizes = [8, 32], strides = [1, 1]} : vector<8x96xf32> to vector<8x32xf32>
    %218 = vector.extract_strided_slice %216 {offsets = [0, 32], sizes = [8, 32], strides = [1, 1]} : vector<8x96xf32> to vector<8x32xf32>
    %219 = vector.extract_strided_slice %216 {offsets = [0, 64], sizes = [8, 32], strides = [1, 1]} : vector<8x96xf32> to vector<8x32xf32>
    %220 = vector.extract_strided_slice %210 {offsets = [0, 96], sizes = [8, 32], strides = [1, 1]} : vector<8x128xf32> to vector<8x32xf32>
    %221 = math.tanh %220 : vector<8x32xf32>
    %222 = arith.mulf %218, %184 : vector<8x32xf32>
    %223 = arith.mulf %217, %221 : vector<8x32xf32>
    %224 = arith.addf %222, %223 : vector<8x32xf32>
    %225 = math.tanh %224 : vector<8x32xf32>
    %226 = arith.mulf %219, %225 : vector<8x32xf32>
    %227 = tpu.concatenate %226, %205 in 1 : vector<8x32xf32>, vector<8x32xf32> -> vector<8x64xf32>
    %cst_39 = arith.constant dense<0.000000e+00> : vector<8x128xf32>
    %228 = tpu.matmul %227, %1, %cst_39 {dimension_numbers = #tpu.dot_dimension_numbers<[1], [0], [0], [1], [0, 0, 1, 1], [], []>} : vector<8x64xf32>, vector<64x128xf32>, vector<8x128xf32> -> vector<8x128xf32>
    %229 = arith.addf %228, %4 : vector<8x128xf32>
    %230 = vector.extract_strided_slice %229 {offsets = [0, 0], sizes = [8, 96], strides = [1, 1]} : vector<8x128xf32> to vector<8x96xf32>
    %231 = arith.negf %230 : vector<8x96xf32>
    %232 = math.exp %231 : vector<8x96xf32>
    %cst_40 = arith.constant 1.000000e+00 : f32
    %233 = vector.broadcast %cst_40 : f32 to vector<8x96xf32>
    %234 = arith.addf %233, %232 : vector<8x96xf32>
    %235 = arith.divf %233, %234 : vector<8x96xf32>
    %236 = vector.extract_strided_slice %235 {offsets = [0, 0], sizes = [8, 32], strides = [1, 1]} : vector<8x96xf32> to vector<8x32xf32>
    %237 = vector.extract_strided_slice %235 {offsets = [0, 32], sizes = [8, 32], strides = [1, 1]} : vector<8x96xf32> to vector<8x32xf32>
    %238 = vector.extract_strided_slice %235 {offsets = [0, 64], sizes = [8, 32], strides = [1, 1]} : vector<8x96xf32> to vector<8x32xf32>
    %239 = vector.extract_strided_slice %229 {offsets = [0, 96], sizes = [8, 32], strides = [1, 1]} : vector<8x128xf32> to vector<8x32xf32>
    %240 = math.tanh %239 : vector<8x32xf32>
    %241 = arith.mulf %237, %203 : vector<8x32xf32>
    %242 = arith.mulf %236, %240 : vector<8x32xf32>
    %243 = arith.addf %241, %242 : vector<8x32xf32>
    %244 = math.tanh %243 : vector<8x32xf32>
    %245 = arith.mulf %238, %244 : vector<8x32xf32>
    %c6_i32 = arith.constant 6 : i32
    %246 = arith.index_cast %c6_i32 : i32 to index
    %c0_41 = arith.constant 0 : index
    %c0_42 = arith.constant 0 : index
    %247 = vector.load %arg0[%246, %c0_41, %c0_42] : memref<8x8x128xf32, #tpu.memory_space<vmem>>, vector<1x8x128xf32>
    %248 = vector.shape_cast %247 : vector<1x8x128xf32> to vector<8x128xf32>
    %cst_43 = arith.constant dense<0.000000e+00> : vector<8x128xf32>
    %249 = tpu.matmul %226, %0, %cst_43 {dimension_numbers = #tpu.dot_dimension_numbers<[1], [0], [0], [1], [0, 0, 1, 1], [], []>} : vector<8x32xf32>, vector<32x128xf32>, vector<8x128xf32> -> vector<8x128xf32>
    %250 = arith.addf %248, %249 : vector<8x128xf32>
    %251 = vector.extract_strided_slice %250 {offsets = [0, 0], sizes = [8, 96], strides = [1, 1]} : vector<8x128xf32> to vector<8x96xf32>
    %252 = arith.negf %251 : vector<8x96xf32>
    %253 = math.exp %252 : vector<8x96xf32>
    %cst_44 = arith.constant 1.000000e+00 : f32
    %254 = vector.broadcast %cst_44 : f32 to vector<8x96xf32>
    %255 = arith.addf %254, %253 : vector<8x96xf32>
    %256 = arith.divf %254, %255 : vector<8x96xf32>
    %257 = vector.extract_strided_slice %256 {offsets = [0, 0], sizes = [8, 32], strides = [1, 1]} : vector<8x96xf32> to vector<8x32xf32>
    %258 = vector.extract_strided_slice %256 {offsets = [0, 32], sizes = [8, 32], strides = [1, 1]} : vector<8x96xf32> to vector<8x32xf32>
    %259 = vector.extract_strided_slice %256 {offsets = [0, 64], sizes = [8, 32], strides = [1, 1]} : vector<8x96xf32> to vector<8x32xf32>
    %260 = vector.extract_strided_slice %250 {offsets = [0, 96], sizes = [8, 32], strides = [1, 1]} : vector<8x128xf32> to vector<8x32xf32>
    %261 = math.tanh %260 : vector<8x32xf32>
    %262 = arith.mulf %258, %224 : vector<8x32xf32>
    %263 = arith.mulf %257, %261 : vector<8x32xf32>
    %264 = arith.addf %262, %263 : vector<8x32xf32>
    %265 = math.tanh %264 : vector<8x32xf32>
    %266 = arith.mulf %259, %265 : vector<8x32xf32>
    %267 = tpu.concatenate %266, %245 in 1 : vector<8x32xf32>, vector<8x32xf32> -> vector<8x64xf32>
    %cst_45 = arith.constant dense<0.000000e+00> : vector<8x128xf32>
    %268 = tpu.matmul %267, %1, %cst_45 {dimension_numbers = #tpu.dot_dimension_numbers<[1], [0], [0], [1], [0, 0, 1, 1], [], []>} : vector<8x64xf32>, vector<64x128xf32>, vector<8x128xf32> -> vector<8x128xf32>
    %269 = arith.addf %268, %4 : vector<8x128xf32>
    %270 = vector.extract_strided_slice %269 {offsets = [0, 0], sizes = [8, 96], strides = [1, 1]} : vector<8x128xf32> to vector<8x96xf32>
    %271 = arith.negf %270 : vector<8x96xf32>
    %272 = math.exp %271 : vector<8x96xf32>
    %cst_46 = arith.constant 1.000000e+00 : f32
    %273 = vector.broadcast %cst_46 : f32 to vector<8x96xf32>
    %274 = arith.addf %273, %272 : vector<8x96xf32>
    %275 = arith.divf %273, %274 : vector<8x96xf32>
    %276 = vector.extract_strided_slice %275 {offsets = [0, 0], sizes = [8, 32], strides = [1, 1]} : vector<8x96xf32> to vector<8x32xf32>
    %277 = vector.extract_strided_slice %275 {offsets = [0, 32], sizes = [8, 32], strides = [1, 1]} : vector<8x96xf32> to vector<8x32xf32>
    %278 = vector.extract_strided_slice %275 {offsets = [0, 64], sizes = [8, 32], strides = [1, 1]} : vector<8x96xf32> to vector<8x32xf32>
    %279 = vector.extract_strided_slice %269 {offsets = [0, 96], sizes = [8, 32], strides = [1, 1]} : vector<8x128xf32> to vector<8x32xf32>
    %280 = math.tanh %279 : vector<8x32xf32>
    %281 = arith.mulf %277, %243 : vector<8x32xf32>
    %282 = arith.mulf %276, %280 : vector<8x32xf32>
    %283 = arith.addf %281, %282 : vector<8x32xf32>
    %284 = math.tanh %283 : vector<8x32xf32>
    %285 = arith.mulf %278, %284 : vector<8x32xf32>
    %c7_i32 = arith.constant 7 : i32
    %286 = arith.index_cast %c7_i32 : i32 to index
    %c0_47 = arith.constant 0 : index
    %c0_48 = arith.constant 0 : index
    %287 = vector.load %arg0[%286, %c0_47, %c0_48] : memref<8x8x128xf32, #tpu.memory_space<vmem>>, vector<1x8x128xf32>
    %288 = vector.shape_cast %287 : vector<1x8x128xf32> to vector<8x128xf32>
    %cst_49 = arith.constant dense<0.000000e+00> : vector<8x128xf32>
    %289 = tpu.matmul %266, %0, %cst_49 {dimension_numbers = #tpu.dot_dimension_numbers<[1], [0], [0], [1], [0, 0, 1, 1], [], []>} : vector<8x32xf32>, vector<32x128xf32>, vector<8x128xf32> -> vector<8x128xf32>
    %290 = arith.addf %288, %289 : vector<8x128xf32>
    %291 = vector.extract_strided_slice %290 {offsets = [0, 0], sizes = [8, 96], strides = [1, 1]} : vector<8x128xf32> to vector<8x96xf32>
    %292 = arith.negf %291 : vector<8x96xf32>
    %293 = math.exp %292 : vector<8x96xf32>
    %cst_50 = arith.constant 1.000000e+00 : f32
    %294 = vector.broadcast %cst_50 : f32 to vector<8x96xf32>
    %295 = arith.addf %294, %293 : vector<8x96xf32>
    %296 = arith.divf %294, %295 : vector<8x96xf32>
    %297 = vector.extract_strided_slice %296 {offsets = [0, 0], sizes = [8, 32], strides = [1, 1]} : vector<8x96xf32> to vector<8x32xf32>
    %298 = vector.extract_strided_slice %296 {offsets = [0, 32], sizes = [8, 32], strides = [1, 1]} : vector<8x96xf32> to vector<8x32xf32>
    %299 = vector.extract_strided_slice %296 {offsets = [0, 64], sizes = [8, 32], strides = [1, 1]} : vector<8x96xf32> to vector<8x32xf32>
    %300 = vector.extract_strided_slice %290 {offsets = [0, 96], sizes = [8, 32], strides = [1, 1]} : vector<8x128xf32> to vector<8x32xf32>
    %301 = math.tanh %300 : vector<8x32xf32>
    %302 = arith.mulf %298, %264 : vector<8x32xf32>
    %303 = arith.mulf %297, %301 : vector<8x32xf32>
    %304 = arith.addf %302, %303 : vector<8x32xf32>
    %305 = math.tanh %304 : vector<8x32xf32>
    %306 = arith.mulf %299, %305 : vector<8x32xf32>
    %307 = tpu.concatenate %306, %285 in 1 : vector<8x32xf32>, vector<8x32xf32> -> vector<8x64xf32>
    %cst_51 = arith.constant dense<0.000000e+00> : vector<8x128xf32>
    %308 = tpu.matmul %307, %1, %cst_51 {dimension_numbers = #tpu.dot_dimension_numbers<[1], [0], [0], [1], [0, 0, 1, 1], [], []>} : vector<8x64xf32>, vector<64x128xf32>, vector<8x128xf32> -> vector<8x128xf32>
    %309 = arith.addf %308, %4 : vector<8x128xf32>
    %310 = vector.extract_strided_slice %309 {offsets = [0, 0], sizes = [8, 96], strides = [1, 1]} : vector<8x128xf32> to vector<8x96xf32>
    %311 = arith.negf %310 : vector<8x96xf32>
    %312 = math.exp %311 : vector<8x96xf32>
    %cst_52 = arith.constant 1.000000e+00 : f32
    %313 = vector.broadcast %cst_52 : f32 to vector<8x96xf32>
    %314 = arith.addf %313, %312 : vector<8x96xf32>
    %315 = arith.divf %313, %314 : vector<8x96xf32>
    %316 = vector.extract_strided_slice %315 {offsets = [0, 0], sizes = [8, 32], strides = [1, 1]} : vector<8x96xf32> to vector<8x32xf32>
    %317 = vector.extract_strided_slice %315 {offsets = [0, 32], sizes = [8, 32], strides = [1, 1]} : vector<8x96xf32> to vector<8x32xf32>
    %318 = vector.extract_strided_slice %315 {offsets = [0, 64], sizes = [8, 32], strides = [1, 1]} : vector<8x96xf32> to vector<8x32xf32>
    %319 = vector.extract_strided_slice %309 {offsets = [0, 96], sizes = [8, 32], strides = [1, 1]} : vector<8x128xf32> to vector<8x32xf32>
    %320 = math.tanh %319 : vector<8x32xf32>
    %321 = arith.mulf %317, %283 : vector<8x32xf32>
    %322 = arith.mulf %316, %320 : vector<8x32xf32>
    %323 = arith.addf %321, %322 : vector<8x32xf32>
    %324 = math.tanh %323 : vector<8x32xf32>
    %325 = arith.mulf %318, %324 : vector<8x32xf32>
    %c8_i32 = arith.constant 8 : i32
    %c0_53 = arith.constant 0 : index
    %c0_54 = arith.constant 0 : index
    %326 = vector.load %arg4[%c0_53, %c0_54] : memref<32x1xf32, #tpu.memory_space<vmem>>, vector<32x1xf32>
    %cst_55 = arith.constant dense<0.000000e+00> : vector<8x1xf32>
    %327 = tpu.matmul %325, %326, %cst_55 {dimension_numbers = #tpu.dot_dimension_numbers<[1], [0], [0], [1], [0, 0, 1, 1], [], []>} : vector<8x32xf32>, vector<32x1xf32>, vector<8x1xf32> -> vector<8x1xf32>
    %c0_56 = arith.constant 0 : index
    %c0_57 = arith.constant 0 : index
    %328 = vector.load %arg5[%c0_56, %c0_57] : memref<1x1xf32, #tpu.memory_space<vmem>>, vector<1x1xf32>
    %329 = vector.broadcast %328 : vector<1x1xf32> to vector<8x1xf32>
    %330 = arith.addf %327, %329 : vector<8x1xf32>
    %c0_58 = arith.constant 0 : index
    %c0_59 = arith.constant 0 : index
    %331 = vector.load %arg6[%c0_58, %c0_59] : memref<8x1xf32, #tpu.memory_space<vmem>>, vector<8x1xf32>
    tpu.vector_store %arg6[%c0_58, %c0_59], %330 {strides = array<i32>} : memref<8x1xf32, #tpu.memory_space<vmem>>, vector<8x1xf32>,
    return
  }
}

</mosaic_0001>

<llo_original>
// kernel: tpu_custom_call.1
$region0: #{tpu_custom_call.1}
  #allocation0 [shape = 'u32[]', space=smem, size = 0x4, offset = 0x4, fixed_abs, tag = 'smem constant byte address 0x4 - core index']
  #allocation1 [shape = 'u32[144,128]{1,0:T(1,128)}', space=vmem, size = 0x12000, scoped, tag = 'internal scratch']
  #allocation2 [shape = 'f32[1,1]{1,0:T(1,128)S(1)}', space=vmem, size = 0x200, scoped, tag = 'scoped memory for tpu_custom_call.1']
  %s0 = inlined_call_operand.hbm [shape: f32[8,8,128], index: 0, kind: input, shape index: {}]
  %s1 = inlined_call_operand.vmem [shape: f32[32,128], index: 1, kind: input, shape index: {}]
  %s2 = inlined_call_operand.hbm [shape: f32[64,128], index: 2, kind: input, shape index: {}]
  %s3 = inlined_call_operand.vmem [shape: f32[1,128], index: 3, kind: input, shape index: {}]
  %s4 = inlined_call_operand.vmem [shape: f32[32,1], index: 4, kind: input, shape index: {}]
  %s5 = inlined_call_operand.<no memory space> [shape: f32[1,1], index: 5, kind: input, shape index: {}]
  %s6 = inlined_call_operand.vmem [shape: f32[8,1], index: 6, kind: output, shape index: {}]
  %s7 = sld [smem:[#allocation0]]
  $region42: #{tpu_custom_call.1} parent=0
    _
  %s9 = ssub.s32 1, %s7
  %s10 = scalar_select 0, %s9, %s7
  %v11 = vstv %s5
  %12 = vst [vmem:[#allocation2] sm:$0x1] %v11
  $region1: #{tpu_custom_call.1} parent=0
    #allocation3 [shape = 'u8[32768]{0}', space=vmem, size = 0x8000, scoped, tag = 'input window, operand 0, single buffered']
    #allocation4 [shape = 's32[1]{0}', space=sflag, size = 0x4, scoped, tag = 'scoped memory for tpu_custom_call.1']
    #allocation5 [shape = 'u8[32768]{0}', space=vmem, size = 0x8000, scoped, tag = 'input window, operand 2, single buffered']
    #allocation6 [shape = 's32[1]{0}', space=sflag, size = 0x4, scoped, tag = 'scoped memory for tpu_custom_call.1']
    %13 = vsyncpa [#allocation4], 0
    %14 = vsyncpa [#allocation6], 0
    // Predicated region
    $region2: #{tpu_custom_call.1} parent=1 // pred_check
      _
    $region3: #{tpu_custom_call.1} parent=1 // pred_check_branch
      %16 = sbr.rel (0) target = $region5
    $region4: #{tpu_custom_call.1} parent=1 // pred_region
      %s18 = ssub.s32 1024, 1024
      %19 = vsyncadd [#allocation4], %s18
      %s20 = sshll.u32 [#allocation3], 4
      %s21 = int_to_ptr.vmem [resolvable:$true] %s20
      %26 = dma.hbm_to_vmem [thread:$0]  %s0, 1024, %s21, [#allocation4], 128, 128, 8
    $region5: #{tpu_custom_call.1} parent=1 // pred_fallthru
      _
    // Predicated region
    $region6: #{tpu_custom_call.1} parent=1 // pred_check
      _
    $region7: #{tpu_custom_call.1} parent=1 // pred_check_branch
      %28 = sbr.rel (0) target = $region9
    $region8: #{tpu_custom_call.1} parent=1 // pred_region
      _
    $region9: #{tpu_custom_call.1} parent=1 // pred_fallthru
      _
    // Predicated region
    $region10: #{tpu_custom_call.1} parent=1 // pred_check
      _
    $region11: #{tpu_custom_call.1} parent=1 // pred_check_branch
      %30 = sbr.rel (0) target = $region13
    $region12: #{tpu_custom_call.1} parent=1 // pred_region
      %s32 = ssub.s32 1024, 1024
      %33 = vsyncadd [#allocation6], %s32
      %s34 = sshll.u32 [#allocation5], 4
      %s35 = int_to_ptr.vmem [resolvable:$true] %s34
      %40 = dma.hbm_to_vmem [thread:$0]  %s2, 1024, %s35, [#allocation6], 128, 128, 8
    $region13: #{tpu_custom_call.1} parent=1 // pred_fallthru
      _
    // Predicated region
    $region14: #{tpu_custom_call.1} parent=1 // pred_check
      _
    $region15: #{tpu_custom_call.1} parent=1 // pred_check_branch
      %42 = sbr.rel (0) target = $region17
    $region16: #{tpu_custom_call.1} parent=1 // pred_region
      _
    $region17: #{tpu_custom_call.1} parent=1 // pred_fallthru
      _
    // Predicated region
    $region18: #{tpu_custom_call.1} parent=1 // pred_check
      _
    $region19: #{tpu_custom_call.1} parent=1 // pred_check_branch
      %44 = sbr.rel (0) target = $region21
    $region20: #{tpu_custom_call.1} parent=1 // pred_region
      _
    $region21: #{tpu_custom_call.1} parent=1 // pred_fallthru
      _
    // Predicated region
    $region22: #{tpu_custom_call.1} parent=1 // pred_check
      _
    $region23: #{tpu_custom_call.1} parent=1 // pred_check_branch
      %46 = sbr.rel (0) target = $region25
    $region24: #{tpu_custom_call.1} parent=1 // pred_region
      _
    $region25: #{tpu_custom_call.1} parent=1 // pred_fallthru
      _
    // Predicated region
    $region26: #{tpu_custom_call.1} parent=1 // pred_check
      _
    $region27: #{tpu_custom_call.1} parent=1 // pred_check_branch
      %48 = sbr.rel (0) target = $region29
    $region28: #{tpu_custom_call.1} parent=1 // pred_region
      %49 = dma.done [#allocation4], 1024
    $region29: #{tpu_custom_call.1} parent=1 // pred_fallthru
      _
    // Predicated region
    $region30: #{tpu_custom_call.1} parent=1 // pred_check
      _
    $region31: #{tpu_custom_call.1} parent=1 // pred_check_branch
      %51 = sbr.rel (0) target = $region33
    $region32: #{tpu_custom_call.1} parent=1 // pred_region
      %52 = dma.done [#allocation6], 1024
    $region33: #{tpu_custom_call.1} parent=1 // pred_fallthru
      _
    %v53 = vld [vmem:[%s1] sm:$0xff]
    %v54 = vld [vmem:[%s1 + $0x8] sm:$0xff]
    %v55 = vld [vmem:[%s1 + $0x10] sm:$0xff]
    %v56 = vld [vmem:[%s1 + $0x18] sm:$0xff]
    %v57 = vld [vmem:[#allocation5] sm:$0xff]
    %v58 = vld [vmem:[#allocation5 + $0x8] sm:$0xff]
    %v59 = vld [vmem:[#allocation5 + $0x10] sm:$0xff]
    %v60 = vld [vmem:[#allocation5 + $0x18] sm:$0xff]
    %v61 = vld [vmem:[#allocation5 + $0x20] sm:$0xff]
    %v62 = vld [vmem:[#allocation5 + $0x28] sm:$0xff]
    %v63 = vld [vmem:[#allocation5 + $0x30] sm:$0xff]
    %v64 = vld [vmem:[#allocation5 + $0x38] sm:$0xff]
    %v65 = vld [vmem:[%s3] sm:$0x1]
    %v67 = vlaneseq
    %v68 = vshrl.u32 %v67, 7
    %v69 = vsub.s32 0, %v68
    %v70 = vrot.slane %v65, %v69
    %v72 = vld [vmem:[#allocation3] sm:$0xff]
    %vm73 = vcmask 261120
    %v75 = vsel %vm73, 0.0, 0
    %77 = vmatprep.subr.mxu0 0.0
    %78 = vmatpush1.msra.mxu0 %v53
    %79 = vmatprep.subr.mxu0 0.0
    %80 = vmatpush1.msra.mxu0 %v54
    %81 = vmatprep.subr.mxu0 0.0
    %82 = vmatpush1.msra.mxu0 %v55
    %83 = vmatprep.subr.mxu0 0.0
    %84 = vmatpush1.msra.mxu0 %v56
    %85 = vmatprep.subr.mxu0 0.0
    %86 = vmatpush1.msra.mxu0 0.0
    %87 = vmatprep.subr.mxu0 0.0
    %88 = vmatpush1.msra.mxu0 0.0
    %89 = vmatprep.subr.mxu0 0.0
    %90 = vmatpush1.msra.mxu0 0.0
    %91 = vmatprep.subr.mxu0 0.0
    %92 = vmatpush1.msra.mxu0 0.0
    %93 = vmatprep.subr.mxu0 0.0
    %94 = vmatpush1.msra.mxu0 0.0
    %95 = vmatprep.subr.mxu0 0.0
    %96 = vmatpush1.msra.mxu0 0.0
    %97 = vmatprep.subr.mxu0 0.0
    %98 = vmatpush1.msra.mxu0 0.0
    %99 = vmatprep.subr.mxu0 0.0
    %100 = vmatpush1.msra.mxu0 0.0
    %101 = vmatprep.subr.mxu0 0.0
    %102 = vmatpush1.msra.mxu0 0.0
    %103 = vmatprep.subr.mxu0 0.0
    %104 = vmatpush1.msra.mxu0 0.0
    %105 = vmatprep.subr.mxu0 0.0
    %106 = vmatpush1.msra.mxu0 0.0
    %107 = vmatprep.subr.mxu0 0.0
    %108 = vmatpush1.msra.mxu0 0.0
    %109 = vmatprep.subr.mxu0 0.0
    %110 = vmatpush1.msra.mxu0 0.0
    %111 = vmatprep.subr.mxu0 0.0
    %112 = vmatpush1.msra.mxu0 0.0
    %113 = vmatprep.subr.mxu0 0.0
    %114 = vmatpush1.msra.mxu0 0.0
    %115 = vmatprep.subr.mxu0 0.0
    %116 = vmatpush1.msra.mxu0 0.0
    %117 = vmatprep.subr.mxu0 0.0
    %118 = vmatpush1.msra.mxu0 0.0
    %119 = vmatprep.subr.mxu0 0.0
    %120 = vmatpush1.msra.mxu0 0.0
    %121 = vmatprep.subr.mxu0 0.0
    %122 = vmatpush1.msra.mxu0 0.0
    %123 = vmatprep.subr.mxu0 0.0
    %124 = vmatpush1.msra.mxu0 0.0
    %125 = vmatprep.subr.mxu0 0.0
    %126 = vmatpush1.msra.mxu0 0.0
    %127 = vmatprep.subr.mxu0 0.0
    %128 = vmatpush1.msra.mxu0 0.0
    %129 = vmatprep.subr.mxu0 0.0
    %130 = vmatpush1.msra.mxu0 0.0
    %131 = vmatprep.subr.mxu0 0.0
    %132 = vmatpush1.msra.mxu0 0.0
    %133 = vmatprep.subr.mxu0 0.0
    %134 = vmatpush1.msra.mxu0 0.0
    %135 = vmatprep.subr.mxu0 0.0
    %136 = vmatpush1.msra.mxu0 0.0
    %137 = vmatprep.subr.mxu0 0.0
    %138 = vmatpush1.msra.mxu0 0.0
    %139 = vmatprep.subr.mxu0 0.0
    %140 = vmatpush1.msra.mxu0 0.0
    %141 = vmatprep.mubr.f32.mxu0 0.0
    %142 = vmatmul.mubr.f32.gmra.mrb[0].mxu0 %v75
    %v143 = vpop.f32.mrb[0].mxu0
    %v144 = vadd.f32 0.0, %v143
    %v145 = vpop.f32.mrb[0].mxu0
    %146 = vdwg.mxu0
    %v147 = vadd.f32 %v72, %v144
    %v148 = vxor.u32 %v147, 2147483648
    %v149 = vmul.f32 %v148, 1.442695
    %v150 = vpow.pop %v149
    %v151 = vadd.f32 %v150, 1.0
    %v152 = vrcp.pop %v151
    %v153 = vmul.f32 1.0, %v152
    %v154 = vtanh.pop %v147
    %v155 = vmul.f32 %v153, 0.0
    %157 = vrot.lane.b32.xlu0 %v154, 32
    %v158 = vpop.permute.xlu0 %157
    %v160 = vmul.f32 %v153, %v158
    %162 = vrot.lane.b32.xlu0 %v160, 32
    %v163 = vpop.permute.xlu0 %162
    %v165 = vadd.f32 %v155, %v163
    %v166 = vtanh.pop %v165
    %168 = vrot.lane.b32.xlu0 %v166, 32
    %v169 = vpop.permute.xlu0 %168
    %v171 = vmul.f32 %v153, %v169
    %173 = vrot.lane.b32.xlu0 %v171, 64
    %v174 = vpop.permute.xlu0 %173
    %v176 = vsel %vm73, %v174, 0.0
    %vm177 = vcmask 523264
    %v179 = vsel %vm177, %v176, 0
    %181 = vmatprep.subr.mxu0 0.0
    %182 = vmatpush1.msra.mxu0 %v57
    %183 = vmatprep.subr.mxu0 0.0
    %184 = vmatpush1.msra.mxu0 %v58
    %185 = vmatprep.subr.mxu0 0.0
    %186 = vmatpush1.msra.mxu0 %v59
    %187 = vmatprep.subr.mxu0 0.0
    %188 = vmatpush1.msra.mxu0 %v60
    %189 = vmatprep.subr.mxu0 0.0
    %190 = vmatpush1.msra.mxu0 %v61
    %191 = vmatprep.subr.mxu0 0.0
    %192 = vmatpush1.msra.mxu0 %v62
    %193 = vmatprep.subr.mxu0 0.0
    %194 = vmatpush1.msra.mxu0 %v63
    %195 = vmatprep.subr.mxu0 0.0
    %196 = vmatpush1.msra.mxu0 %v64
    %197 = vmatprep.subr.mxu0 0.0
    %198 = vmatpush1.msra.mxu0 0.0
    %199 = vmatprep.subr.mxu0 0.0
    %200 = vmatpush1.msra.mxu0 0.0
    %201 = vmatprep.subr.mxu0 0.0
    %202 = vmatpush1.msra.mxu0 0.0
    %203 = vmatprep.subr.mxu0 0.0
    %204 = vmatpush1.msra.mxu0 0.0
    %205 = vmatprep.subr.mxu0 0.0
    %206 = vmatpush1.msra.mxu0 0.0
    %207 = vmatprep.subr.mxu0 0.0
    %208 = vmatpush1.msra.mxu0 0.0
    %209 = vmatprep.subr.mxu0 0.0
    %210 = vmatpush1.msra.mxu0 0.0
    %211 = vmatprep.subr.mxu0 0.0
    %212 = vmatpush1.msra.mxu0 0.0
    %213 = vmatprep.subr.mxu0 0.0
    %214 = vmatpush1.msra.mxu0 0.0
    %215 = vmatprep.subr.mxu0 0.0
    %216 = vmatpush1.msra.mxu0 0.0
    %217 = vmatprep.subr.mxu0 0.0
    %218 = vmatpush1.msra.mxu0 0.0
    %219 = vmatprep.subr.mxu0 0.0
    %220 = vmatpush1.msra.mxu0 0.0
    %221 = vmatprep.subr.mxu0 0.0
    %222 = vmatpush1.msra.mxu0 0.0
    %223 = vmatprep.subr.mxu0 0.0
    %224 = vmatpush1.msra.mxu0 0.0
    %225 = vmatprep.subr.mxu0 0.0
    %226 = vmatpush1.msra.mxu0 0.0
    %227 = vmatprep.subr.mxu0 0.0
    %228 = vmatpush1.msra.mxu0 0.0
    %229 = vmatprep.subr.mxu0 0.0
    %230 = vmatpush1.msra.mxu0 0.0
    %231 = vmatprep.subr.mxu0 0.0
    %232 = vmatpush1.msra.mxu0 0.0
    %233 = vmatprep.subr.mxu0 0.0
    %234 = vmatpush1.msra.mxu0 0.0
    %235 = vmatprep.subr.mxu0 0.0
    %236 = vmatpush1.msra.mxu0 0.0
    %237 = vmatprep.subr.mxu0 0.0
    %238 = vmatpush1.msra.mxu0 0.0
    %239 = vmatprep.subr.mxu0 0.0
    %240 = vmatpush1.msra.mxu0 0.0
    %241 = vmatprep.subr.mxu0 0.0
    %242 = vmatpush1.msra.mxu0 0.0
    %243 = vmatprep.subr.mxu0 0.0
    %244 = vmatpush1.msra.mxu0 0.0
    %245 = vmatprep.mubr.f32.mxu0 0.0
    %246 = vmatmul.mubr.f32.gmra.mrb[0].mxu0 %v179
    %v247 = vpop.f32.mrb[0].mxu0
    %v248 = vadd.f32 %v70, %v247
    %v249 = vpop.f32.mrb[0].mxu0
    %250 = vdwg.mxu0
    %v251 = vxor.u32 %v248, 2147483648
    %v252 = vmul.f32 %v251, 1.442695
    %v253 = vpow.pop %v252
    %v254 = vadd.f32 %v253, 1.0
    %v255 = vrcp.pop %v254
    %v256 = vmul.f32 1.0, %v255
    %v257 = vtanh.pop %v248
    %v258 = vmul.f32 %v256, 0.0
    %260 = vrot.lane.b32.xlu0 %v257, 32
    %v261 = vpop.permute.xlu0 %260
    %v263 = vmul.f32 %v256, %v261
    %265 = vrot.lane.b32.xlu0 %v263, 32
    %v266 = vpop.permute.xlu0 %265
    %v268 = vadd.f32 %v258, %v266
    %v269 = vtanh.pop %v268
    %271 = vrot.lane.b32.xlu0 %v269, 32
    %v272 = vpop.permute.xlu0 %271
    %v274 = vmul.f32 %v256, %v272
    %s275 = scalar_lea.vmem [#allocation3], 8
    %v276 = vld [vmem:[%s275] sm:$0xff]
    %v277 = vsel %vm73, %v174, 0
    %279 = vmatprep.subr.mxu0 0.0
    %280 = vmatpush1.msra.mxu0 %v53
    %281 = vmatprep.subr.mxu0 0.0
    %282 = vmatpush1.msra.mxu0 %v54
    %283 = vmatprep.subr.mxu0 0.0
    %284 = vmatpush1.msra.mxu0 %v55
    %285 = vmatprep.subr.mxu0 0.0
    %286 = vmatpush1.msra.mxu0 %v56
    %287 = vmatprep.subr.mxu0 0.0
    %288 = vmatpush1.msra.mxu0 0.0
    %289 = vmatprep.subr.mxu0 0.0
    %290 = vmatpush1.msra.mxu0 0.0
    %291 = vmatprep.subr.mxu0 0.0
    %292 = vmatpush1.msra.mxu0 0.0
    %293 = vmatprep.subr.mxu0 0.0
    %294 = vmatpush1.msra.mxu0 0.0
    %295 = vmatprep.subr.mxu0 0.0
    %296 = vmatpush1.msra.mxu0 0.0
    %297 = vmatprep.subr.mxu0 0.0
    %298 = vmatpush1.msra.mxu0 0.0
    %299 = vmatprep.subr.mxu0 0.0
    %300 = vmatpush1.msra.mxu0 0.0
    %301 = vmatprep.subr.mxu0 0.0
    %302 = vmatpush1.msra.mxu0 0.0
    %303 = vmatprep.subr.mxu0 0.0
    %304 = vmatpush1.msra.mxu0 0.0
    %305 = vmatprep.subr.mxu0 0.0
    %306 = vmatpush1.msra.mxu0 0.0
    %307 = vmatprep.subr.mxu0 0.0
    %308 = vmatpush1.msra.mxu0 0.0
    %309 = vmatprep.subr.mxu0 0.0
    %310 = vmatpush1.msra.mxu0 0.0
    %311 = vmatprep.subr.mxu0 0.0
    %312 = vmatpush1.msra.mxu0 0.0
    %313 = vmatprep.subr.mxu0 0.0
    %314 = vmatpush1.msra.mxu0 0.0
    %315 = vmatprep.subr.mxu0 0.0
    %316 = vmatpush1.msra.mxu0 0.0
    %317 = vmatprep.subr.mxu0 0.0
    %318 = vmatpush1.msra.mxu0 0.0
    %319 = vmatprep.subr.mxu0 0.0
    %320 = vmatpush1.msra.mxu0 0.0
    %321 = vmatprep.subr.mxu0 0.0
    %322 = vmatpush1.msra.mxu0 0.0
    %323 = vmatprep.subr.mxu0 0.0
    %324 = vmatpush1.msra.mxu0 0.0
    %325 = vmatprep.subr.mxu0 0.0
    %326 = vmatpush1.msra.mxu0 0.0
    %327 = vmatprep.subr.mxu0 0.0
    %328 = vmatpush1.msra.mxu0 0.0
    %329 = vmatprep.subr.mxu0 0.0
    %330 = vmatpush1.msra.mxu0 0.0
    %331 = vmatprep.subr.mxu0 0.0
    %332 = vmatpush1.msra.mxu0 0.0
    %333 = vmatprep.subr.mxu0 0.0
    %334 = vmatpush1.msra.mxu0 0.0
    %335 = vmatprep.subr.mxu0 0.0
    %336 = vmatpush1.msra.mxu0 0.0
    %337 = vmatprep.subr.mxu0 0.0
    %338 = vmatpush1.msra.mxu0 0.0
    %339 = vmatprep.subr.mxu0 0.0
    %340 = vmatpush1.msra.mxu0 0.0
    %341 = vmatprep.subr.mxu0 0.0
    %342 = vmatpush1.msra.mxu0 0.0
    %343 = vmatprep.mubr.f32.mxu0 0.0
    %344 = vmatmul.mubr.f32.gmra.mrb[0].mxu0 %v277
    %v345 = vpop.f32.mrb[0].mxu0
    %v346 = vadd.f32 0.0, %v345
    %v347 = vpop.f32.mrb[0].mxu0
    %348 = vdwg.mxu0
    %v349 = vadd.f32 %v276, %v346
    %v350 = vxor.u32 %v349, 2147483648
    %v351 = vmul.f32 %v350, 1.442695
    %v352 = vpow.pop %v351
    %v353 = vadd.f32 %v352, 1.0
    %v354 = vrcp.pop %v353
    %v355 = vmul.f32 1.0, %v354
    %v356 = vtanh.pop %v349
    %v357 = vmul.f32 %v355, %v165
    %359 = vrot.lane.b32.xlu0 %v356, 32
    %v360 = vpop.permute.xlu0 %359
    %v362 = vmul.f32 %v355, %v360
    %364 = vrot.lane.b32.xlu0 %v362, 32
    %v365 = vpop.permute.xlu0 %364
    %v367 = vadd.f32 %v357, %v365
    %v368 = vtanh.pop %v367
    %370 = vrot.lane.b32.xlu0 %v368, 32
    %v371 = vpop.permute.xlu0 %370
    %v373 = vmul.f32 %v355, %v371
    %375 = vrot.lane.b32.xlu0 %v373, 64
    %v376 = vpop.permute.xlu0 %375
    %379 = vrot.lane.b32.xlu0 %v274, 96
    %v380 = vpop.permute.xlu0 %379
    %v382 = vsel %vm73, %v376, %v380
    %v384 = vsel %vm177, %v382, 0
    %386 = vmatprep.subr.mxu0 0.0
    %387 = vmatpush1.msra.mxu0 %v57
    %388 = vmatprep.subr.mxu0 0.0
    %389 = vmatpush1.msra.mxu0 %v58
    %390 = vmatprep.subr.mxu0 0.0
    %391 = vmatpush1.msra.mxu0 %v59
    %392 = vmatprep.subr.mxu0 0.0
    %393 = vmatpush1.msra.mxu0 %v60
    %394 = vmatprep.subr.mxu0 0.0
    %395 = vmatpush1.msra.mxu0 %v61
    %396 = vmatprep.subr.mxu0 0.0
    %397 = vmatpush1.msra.mxu0 %v62
    %398 = vmatprep.subr.mxu0 0.0
    %399 = vmatpush1.msra.mxu0 %v63
    %400 = vmatprep.subr.mxu0 0.0
    %401 = vmatpush1.msra.mxu0 %v64
    %402 = vmatprep.subr.mxu0 0.0
    %403 = vmatpush1.msra.mxu0 0.0
    %404 = vmatprep.subr.mxu0 0.0
    %405 = vmatpush1.msra.mxu0 0.0
    %406 = vmatprep.subr.mxu0 0.0
    %407 = vmatpush1.msra.mxu0 0.0
    %408 = vmatprep.subr.mxu0 0.0
    %409 = vmatpush1.msra.mxu0 0.0
    %410 = vmatprep.subr.mxu0 0.0
    %411 = vmatpush1.msra.mxu0 0.0
    %412 = vmatprep.subr.mxu0 0.0
    %413 = vmatpush1.msra.mxu0 0.0
    %414 = vmatprep.subr.mxu0 0.0
    %415 = vmatpush1.msra.mxu0 0.0
    %416 = vmatprep.subr.mxu0 0.0
    %417 = vmatpush1.msra.mxu0 0.0
    %418 = vmatprep.subr.mxu0 0.0
    %419 = vmatpush1.msra.mxu0 0.0
    %420 = vmatprep.subr.mxu0 0.0
    %421 = vmatpush1.msra.mxu0 0.0
    %422 = vmatprep.subr.mxu0 0.0
    %423 = vmatpush1.msra.mxu0 0.0
    %424 = vmatprep.subr.mxu0 0.0
    %425 = vmatpush1.msra.mxu0 0.0
    %426 = vmatprep.subr.mxu0 0.0
    %427 = vmatpush1.msra.mxu0 0.0
    %428 = vmatprep.subr.mxu0 0.0
    %429 = vmatpush1.msra.mxu0 0.0
    %430 = vmatprep.subr.mxu0 0.0
    %431 = vmatpush1.msra.mxu0 0.0
    %432 = vmatprep.subr.mxu0 0.0
    %433 = vmatpush1.msra.mxu0 0.0
    %434 = vmatprep.subr.mxu0 0.0
    %435 = vmatpush1.msra.mxu0 0.0
    %436 = vmatprep.subr.mxu0 0.0
    %437 = vmatpush1.msra.mxu0 0.0
    %438 = vmatprep.subr.mxu0 0.0
    %439 = vmatpush1.msra.mxu0 0.0
    %440 = vmatprep.subr.mxu0 0.0
    %441 = vmatpush1.msra.mxu0 0.0
    %442 = vmatprep.subr.mxu0 0.0
    %443 = vmatpush1.msra.mxu0 0.0
    %444 = vmatprep.subr.mxu0 0.0
    %445 = vmatpush1.msra.mxu0 0.0
    %446 = vmatprep.subr.mxu0 0.0
    %447 = vmatpush1.msra.mxu0 0.0
    %448 = vmatprep.subr.mxu0 0.0
    %449 = vmatpush1.msra.mxu0 0.0
    %450 = vmatprep.mubr.f32.mxu0 0.0
    %451 = vmatmul.mubr.f32.gmra.mrb[0].mxu0 %v384
    %v452 = vpop.f32.mrb[0].mxu0
    %v453 = vadd.f32 %v70, %v452
    %v454 = vpop.f32.mrb[0].mxu0
    %455 = vdwg.mxu0
    %v456 = vxor.u32 %v453, 2147483648
    %v457 = vmul.f32 %v456, 1.442695
    %v458 = vpow.pop %v457
    %v459 = vadd.f32 %v458, 1.0
    %v460 = vrcp.pop %v459
    %v461 = vmul.f32 1.0, %v460
    %v462 = vtanh.pop %v453
    %v463 = vmul.f32 %v461, %v268
    %465 = vrot.lane.b32.xlu0 %v462, 32
    %v466 = vpop.permute.xlu0 %465
    %v468 = vmul.f32 %v461, %v466
    %470 = vrot.lane.b32.xlu0 %v468, 32
    %v471 = vpop.permute.xlu0 %470
    %v473 = vadd.f32 %v463, %v471
    %v474 = vtanh.pop %v473
    %476 = vrot.lane.b32.xlu0 %v474, 32
    %v477 = vpop.permute.xlu0 %476
    %v479 = vmul.f32 %v461, %v477
    %s480 = scalar_lea.vmem [#allocation3], 16
    %v481 = vld [vmem:[%s480] sm:$0xff]
    %v482 = vsel %vm73, %v376, 0
    %484 = vmatprep.subr.mxu0 0.0
    %485 = vmatpush1.msra.mxu0 %v53
    %486 = vmatprep.subr.mxu0 0.0
    %487 = vmatpush1.msra.mxu0 %v54
    %488 = vmatprep.subr.mxu0 0.0
    %489 = vmatpush1.msra.mxu0 %v55
    %490 = vmatprep.subr.mxu0 0.0
    %491 = vmatpush1.msra.mxu0 %v56
    %492 = vmatprep.subr.mxu0 0.0
    %493 = vmatpush1.msra.mxu0 0.0
    %494 = vmatprep.subr.mxu0 0.0
    %495 = vmatpush1.msra.mxu0 0.0
    %496 = vmatprep.subr.mxu0 0.0
    %497 = vmatpush1.msra.mxu0 0.0
    %498 = vmatprep.subr.mxu0 0.0
    %499 = vmatpush1.msra.mxu0 0.0
    %500 = vmatprep.subr.mxu0 0.0
    %501 = vmatpush1.msra.mxu0 0.0
    %502 = vmatprep.subr.mxu0 0.0
    %503 = vmatpush1.msra.mxu0 0.0
    %504 = vmatprep.subr.mxu0 0.0
    %505 = vmatpush1.msra.mxu0 0.0
    %506 = vmatprep.subr.mxu0 0.0
    %507 = vmatpush1.msra.mxu0 0.0
    %508 = vmatprep.subr.mxu0 0.0
    %509 = vmatpush1.msra.mxu0 0.0
    %510 = vmatprep.subr.mxu0 0.0
    %511 = vmatpush1.msra.mxu0 0.0
    %512 = vmatprep.subr.mxu0 0.0
    %513 = vmatpush1.msra.mxu0 0.0
    %514 = vmatprep.subr.mxu0 0.0
    %515 = vmatpush1.msra.mxu0 0.0
    %516 = vmatprep.subr.mxu0 0.0
    %517 = vmatpush1.msra.mxu0 0.0
    %518 = vmatprep.subr.mxu0 0.0
    %519 = vmatpush1.msra.mxu0 0.0
    %520 = vmatprep.subr.mxu0 0.0
    %521 = vmatpush1.msra.mxu0 0.0
    %522 = vmatprep.subr.mxu0 0.0
    %523 = vmatpush1.msra.mxu0 0.0
    %524 = vmatprep.subr.mxu0 0.0
    %525 = vmatpush1.msra.mxu0 0.0
    %526 = vmatprep.subr.mxu0 0.0
    %527 = vmatpush1.msra.mxu0 0.0
    %528 = vmatprep.subr.mxu0 0.0
    %529 = vmatpush1.msra.mxu0 0.0
    %530 = vmatprep.subr.mxu0 0.0
    %531 = vmatpush1.msra.mxu0 0.0
    %532 = vmatprep.subr.mxu0 0.0
    %533 = vmatpush1.msra.mxu0 0.0
    %534 = vmatprep.subr.mxu0 0.0
    %535 = vmatpush1.msra.mxu0 0.0
    %536 = vmatprep.subr.mxu0 0.0
    %537 = vmatpush1.msra.mxu0 0.0
    %538 = vmatprep.subr.mxu0 0.0
    %539 = vmatpush1.msra.mxu0 0.0
    %540 = vmatprep.subr.mxu0 0.0
    %541 = vmatpush1.msra.mxu0 0.0
    %542 = vmatprep.subr.mxu0 0.0
    %543 = vmatpush1.msra.mxu0 0.0
    %544 = vmatprep.subr.mxu0 0.0
    %545 = vmatpush1.msra.mxu0 0.0
    %546 = vmatprep.subr.mxu0 0.0
    %547 = vmatpush1.msra.mxu0 0.0
    %548 = vmatprep.mubr.f32.mxu0 0.0
    %549 = vmatmul.mubr.f32.gmra.mrb[0].mxu0 %v482
    %v550 = vpop.f32.mrb[0].mxu0
    %v551 = vadd.f32 0.0, %v550
    %v552 = vpop.f32.mrb[0].mxu0
    %553 = vdwg.mxu0
    %v554 = vadd.f32 %v481, %v551
    %v555 = vxor.u32 %v554, 2147483648
    %v556 = vmul.f32 %v555, 1.442695
    %v557 = vpow.pop %v556
    %v558 = vadd.f32 %v557, 1.0
    %v559 = vrcp.pop %v558
    %v560 = vmul.f32 1.0, %v559
    %v561 = vtanh.pop %v554
    %v562 = vmul.f32 %v560, %v367
    %564 = vrot.lane.b32.xlu0 %v561, 32
    %v565 = vpop.permute.xlu0 %564
    %v567 = vmul.f32 %v560, %v565
    %569 = vrot.lane.b32.xlu0 %v567, 32
    %v570 = vpop.permute.xlu0 %569
    %v572 = vadd.f32 %v562, %v570
    %v573 = vtanh.pop %v572
    %575 = vrot.lane.b32.xlu0 %v573, 32
    %v576 = vpop.permute.xlu0 %575
    %v578 = vmul.f32 %v560, %v576
    %580 = vrot.lane.b32.xlu0 %v578, 64
    %v581 = vpop.permute.xlu0 %580
    %584 = vrot.lane.b32.xlu0 %v479, 96
    %v585 = vpop.permute.xlu0 %584
    %v587 = vsel %vm73, %v581, %v585
    %v589 = vsel %vm177, %v587, 0
    %591 = vmatprep.subr.mxu0 0.0
    %592 = vmatpush1.msra.mxu0 %v57
    %593 = vmatprep.subr.mxu0 0.0
    %594 = vmatpush1.msra.mxu0 %v58
    %595 = vmatprep.subr.mxu0 0.0
    %596 = vmatpush1.msra.mxu0 %v59
    %597 = vmatprep.subr.mxu0 0.0
    %598 = vmatpush1.msra.mxu0 %v60
    %599 = vmatprep.subr.mxu0 0.0
    %600 = vmatpush1.msra.mxu0 %v61
    %601 = vmatprep.subr.mxu0 0.0
    %602 = vmatpush1.msra.mxu0 %v62
    %603 = vmatprep.subr.mxu0 0.0
    %604 = vmatpush1.msra.mxu0 %v63
    %605 = vmatprep.subr.mxu0 0.0
    %606 = vmatpush1.msra.mxu0 %v64
    %607 = vmatprep.subr.mxu0 0.0
    %608 = vmatpush1.msra.mxu0 0.0
    %609 = vmatprep.subr.mxu0 0.0
    %610 = vmatpush1.msra.mxu0 0.0
    %611 = vmatprep.subr.mxu0 0.0
    %612 = vmatpush1.msra.mxu0 0.0
    %613 = vmatprep.subr.mxu0 0.0
    %614 = vmatpush1.msra.mxu0 0.0
    %615 = vmatprep.subr.mxu0 0.0
    %616 = vmatpush1.msra.mxu0 0.0
    %617 = vmatprep.subr.mxu0 0.0
    %618 = vmatpush1.msra.mxu0 0.0
    %619 = vmatprep.subr.mxu0 0.0
    %620 = vmatpush1.msra.mxu0 0.0
    %621 = vmatprep.subr.mxu0 0.0
    %622 = vmatpush1.msra.mxu0 0.0
    %623 = vmatprep.subr.mxu0 0.0
    %624 = vmatpush1.msra.mxu0 0.0
    %625 = vmatprep.subr.mxu0 0.0
    %626 = vmatpush1.msra.mxu0 0.0
    %627 = vmatprep.subr.mxu0 0.0
    %628 = vmatpush1.msra.mxu0 0.0
    %629 = vmatprep.subr.mxu0 0.0
    %630 = vmatpush1.msra.mxu0 0.0
    %631 = vmatprep.subr.mxu0 0.0
    %632 = vmatpush1.msra.mxu0 0.0
    %633 = vmatprep.subr.mxu0 0.0
    %634 = vmatpush1.msra.mxu0 0.0
    %635 = vmatprep.subr.mxu0 0.0
    %636 = vmatpush1.msra.mxu0 0.0
    %637 = vmatprep.subr.mxu0 0.0
    %638 = vmatpush1.msra.mxu0 0.0
    %639 = vmatprep.subr.mxu0 0.0
    %640 = vmatpush1.msra.mxu0 0.0
    %641 = vmatprep.subr.mxu0 0.0
    %642 = vmatpush1.msra.mxu0 0.0
    %643 = vmatprep.subr.mxu0 0.0
    %644 = vmatpush1.msra.mxu0 0.0
    %645 = vmatprep.subr.mxu0 0.0
    %646 = vmatpush1.msra.mxu0 0.0
    %647 = vmatprep.subr.mxu0 0.0
    %648 = vmatpush1.msra.mxu0 0.0
    %649 = vmatprep.subr.mxu0 0.0
    %650 = vmatpush1.msra.mxu0 0.0
    %651 = vmatprep.subr.mxu0 0.0
    %652 = vmatpush1.msra.mxu0 0.0
    %653 = vmatprep.subr.mxu0 0.0
    %654 = vmatpush1.msra.mxu0 0.0
    %655 = vmatprep.mubr.f32.mxu0 0.0
    %656 = vmatmul.mubr.f32.gmra.mrb[0].mxu0 %v589
    %v657 = vpop.f32.mrb[0].mxu0
    %v658 = vadd.f32 %v70, %v657
    %v659 = vpop.f32.mrb[0].mxu0
    %660 = vdwg.mxu0
    %v661 = vxor.u32 %v658, 2147483648
    %v662 = vmul.f32 %v661, 1.442695
    %v663 = vpow.pop %v662
    %v664 = vadd.f32 %v663, 1.0
    %v665 = vrcp.pop %v664
    %v666 = vmul.f32 1.0, %v665
    %v667 = vtanh.pop %v658
    %v668 = vmul.f32 %v666, %v473
    %670 = vrot.lane.b32.xlu0 %v667, 32
    %v671 = vpop.permute.xlu0 %670
    %v673 = vmul.f32 %v666, %v671
    %675 = vrot.lane.b32.xlu0 %v673, 32
    %v676 = vpop.permute.xlu0 %675
    %v678 = vadd.f32 %v668, %v676
    %v679 = vtanh.pop %v678
    %681 = vrot.lane.b32.xlu0 %v679, 32
    %v682 = vpop.permute.xlu0 %681
    %v684 = vmul.f32 %v666, %v682
    %s685 = scalar_lea.vmem [#allocation3], 24
    %v686 = vld [vmem:[%s685] sm:$0xff]
    %v687 = vsel %vm73, %v581, 0
    %689 = vmatprep.subr.mxu0 0.0
    %690 = vmatpush1.msra.mxu0 %v53
    %691 = vmatprep.subr.mxu0 0.0
    %692 = vmatpush1.msra.mxu0 %v54
    %693 = vmatprep.subr.mxu0 0.0
    %694 = vmatpush1.msra.mxu0 %v55
    %695 = vmatprep.subr.mxu0 0.0
    %696 = vmatpush1.msra.mxu0 %v56
    %697 = vmatprep.subr.mxu0 0.0
    %698 = vmatpush1.msra.mxu0 0.0
    %699 = vmatprep.subr.mxu0 0.0
    %700 = vmatpush1.msra.mxu0 0.0
    %701 = vmatprep.subr.mxu0 0.0
    %702 = vmatpush1.msra.mxu0 0.0
    %703 = vmatprep.subr.mxu0 0.0
    %704 = vmatpush1.msra.mxu0 0.0
    %705 = vmatprep.subr.mxu0 0.0
    %706 = vmatpush1.msra.mxu0 0.0
    %707 = vmatprep.subr.mxu0 0.0
    %708 = vmatpush1.msra.mxu0 0.0
    %709 = vmatprep.subr.mxu0 0.0
    %710 = vmatpush1.msra.mxu0 0.0
    %711 = vmatprep.subr.mxu0 0.0
    %712 = vmatpush1.msra.mxu0 0.0
    %713 = vmatprep.subr.mxu0 0.0
    %714 = vmatpush1.msra.mxu0 0.0
    %715 = vmatprep.subr.mxu0 0.0
    %716 = vmatpush1.msra.mxu0 0.0
    %717 = vmatprep.subr.mxu0 0.0
    %718 = vmatpush1.msra.mxu0 0.0
    %719 = vmatprep.subr.mxu0 0.0
    %720 = vmatpush1.msra.mxu0 0.0
    %721 = vmatprep.subr.mxu0 0.0
    %722 = vmatpush1.msra.mxu0 0.0
    %723 = vmatprep.subr.mxu0 0.0
    %724 = vmatpush1.msra.mxu0 0.0
    %725 = vmatprep.subr.mxu0 0.0
    %726 = vmatpush1.msra.mxu0 0.0
    %727 = vmatprep.subr.mxu0 0.0
    %728 = vmatpush1.msra.mxu0 0.0
    %729 = vmatprep.subr.mxu0 0.0
    %730 = vmatpush1.msra.mxu0 0.0
    %731 = vmatprep.subr.mxu0 0.0
    %732 = vmatpush1.msra.mxu0 0.0
    %733 = vmatprep.subr.mxu0 0.0
    %734 = vmatpush1.msra.mxu0 0.0
    %735 = vmatprep.subr.mxu0 0.0
    %736 = vmatpush1.msra.mxu0 0.0
    %737 = vmatprep.subr.mxu0 0.0
    %738 = vmatpush1.msra.mxu0 0.0
    %739 = vmatprep.subr.mxu0 0.0
    %740 = vmatpush1.msra.mxu0 0.0
    %741 = vmatprep.subr.mxu0 0.0
    %742 = vmatpush1.msra.mxu0 0.0
    %743 = vmatprep.subr.mxu0 0.0
    %744 = vmatpush1.msra.mxu0 0.0
    %745 = vmatprep.subr.mxu0 0.0
    %746 = vmatpush1.msra.mxu0 0.0
    %747 = vmatprep.subr.mxu0 0.0
    %748 = vmatpush1.msra.mxu0 0.0
    %749 = vmatprep.subr.mxu0 0.0
    %750 = vmatpush1.msra.mxu0 0.0
    %751 = vmatprep.subr.mxu0 0.0
    %752 = vmatpush1.msra.mxu0 0.0
    %753 = vmatprep.mubr.f32.mxu0 0.0
    %754 = vmatmul.mubr.f32.gmra.mrb[0].mxu0 %v687
    %v755 = vpop.f32.mrb[0].mxu0
    %v756 = vadd.f32 0.0, %v755
    %v757 = vpop.f32.mrb[0].mxu0
    %758 = vdwg.mxu0
    %v759 = vadd.f32 %v686, %v756
    %v760 = vxor.u32 %v759, 2147483648
    %v761 = vmul.f32 %v760, 1.442695
    %v762 = vpow.pop %v761
    %v763 = vadd.f32 %v762, 1.0
    %v764 = vrcp.pop %v763
    %v765 = vmul.f32 1.0, %v764
    %v766 = vtanh.pop %v759
    %v767 = vmul.f32 %v765, %v572
    %769 = vrot.lane.b32.xlu0 %v766, 32
    %v770 = vpop.permute.xlu0 %769
    %v772 = vmul.f32 %v765, %v770
    %774 = vrot.lane.b32.xlu0 %v772, 32
    %v775 = vpop.permute.xlu0 %774
    %v777 = vadd.f32 %v767, %v775
    %v778 = vtanh.pop %v777
    %780 = vrot.lane.b32.xlu0 %v778, 32
    %v781 = vpop.permute.xlu0 %780
    %v783 = vmul.f32 %v765, %v781
    %785 = vrot.lane.b32.xlu0 %v783, 64
    %v786 = vpop.permute.xlu0 %785
    %789 = vrot.lane.b32.xlu0 %v684, 96
    %v790 = vpop.permute.xlu0 %789
    %v792 = vsel %vm73, %v786, %v790
    %v794 = vsel %vm177, %v792, 0
    %796 = vmatprep.subr.mxu0 0.0
    %797 = vmatpush1.msra.mxu0 %v57
    %798 = vmatprep.subr.mxu0 0.0
    %799 = vmatpush1.msra.mxu0 %v58
    %800 = vmatprep.subr.mxu0 0.0
    %801 = vmatpush1.msra.mxu0 %v59
    %802 = vmatprep.subr.mxu0 0.0
    %803 = vmatpush1.msra.mxu0 %v60
    %804 = vmatprep.subr.mxu0 0.0
    %805 = vmatpush1.msra.mxu0 %v61
    %806 = vmatprep.subr.mxu0 0.0
    %807 = vmatpush1.msra.mxu0 %v62
    %808 = vmatprep.subr.mxu0 0.0
    %809 = vmatpush1.msra.mxu0 %v63
    %810 = vmatprep.subr.mxu0 0.0
    %811 = vmatpush1.msra.mxu0 %v64
    %812 = vmatprep.subr.mxu0 0.0
    %813 = vmatpush1.msra.mxu0 0.0
    %814 = vmatprep.subr.mxu0 0.0
    %815 = vmatpush1.msra.mxu0 0.0
    %816 = vmatprep.subr.mxu0 0.0
    %817 = vmatpush1.msra.mxu0 0.0
    %818 = vmatprep.subr.mxu0 0.0
    %819 = vmatpush1.msra.mxu0 0.0
    %820 = vmatprep.subr.mxu0 0.0
    %821 = vmatpush1.msra.mxu0 0.0
    %822 = vmatprep.subr.mxu0 0.0
    %823 = vmatpush1.msra.mxu0 0.0
    %824 = vmatprep.subr.mxu0 0.0
    %825 = vmatpush1.msra.mxu0 0.0
    %826 = vmatprep.subr.mxu0 0.0
    %827 = vmatpush1.msra.mxu0 0.0
    %828 = vmatprep.subr.mxu0 0.0
    %829 = vmatpush1.msra.mxu0 0.0
    %830 = vmatprep.subr.mxu0 0.0
    %831 = vmatpush1.msra.mxu0 0.0
    %832 = vmatprep.subr.mxu0 0.0
    %833 = vmatpush1.msra.mxu0 0.0
    %834 = vmatprep.subr.mxu0 0.0
    %835 = vmatpush1.msra.mxu0 0.0
    %836 = vmatprep.subr.mxu0 0.0
    %837 = vmatpush1.msra.mxu0 0.0
    %838 = vmatprep.subr.mxu0 0.0
    %839 = vmatpush1.msra.mxu0 0.0
    %840 = vmatprep.subr.mxu0 0.0
    %841 = vmatpush1.msra.mxu0 0.0
    %842 = vmatprep.subr.mxu0 0.0
    %843 = vmatpush1.msra.mxu0 0.0
    %844 = vmatprep.subr.mxu0 0.0
    %845 = vmatpush1.msra.mxu0 0.0
    %846 = vmatprep.subr.mxu0 0.0
    %847 = vmatpush1.msra.mxu0 0.0
    %848 = vmatprep.subr.mxu0 0.0
    %849 = vmatpush1.msra.mxu0 0.0
    %850 = vmatprep.subr.mxu0 0.0
    %851 = vmatpush1.msra.mxu0 0.0
    %852 = vmatprep.subr.mxu0 0.0
    %853 = vmatpush1.msra.mxu0 0.0
    %854 = vmatprep.subr.mxu0 0.0
    %855 = vmatpush1.msra.mxu0 0.0
    %856 = vmatprep.subr.mxu0 0.0
    %857 = vmatpush1.msra.mxu0 0.0
    %858 = vmatprep.subr.mxu0 0.0
    %859 = vmatpush1.msra.mxu0 0.0
    %860 = vmatprep.mubr.f32.mxu0 0.0
    %861 = vmatmul.mubr.f32.gmra.mrb[0].mxu0 %v794
    %v862 = vpop.f32.mrb[0].mxu0
    %v863 = vadd.f32 %v70, %v862
    %v864 = vpop.f32.mrb[0].mxu0
    %865 = vdwg.mxu0
    %v866 = vxor.u32 %v863, 2147483648
    %v867 = vmul.f32 %v866, 1.442695
    %v868 = vpow.pop %v867
    %v869 = vadd.f32 %v868, 1.0
    %v870 = vrcp.pop %v869
    %v871 = vmul.f32 1.0, %v870
    %v872 = vtanh.pop %v863
    %v873 = vmul.f32 %v871, %v678
    %875 = vrot.lane.b32.xlu0 %v872, 32
    %v876 = vpop.permute.xlu0 %875
    %v878 = vmul.f32 %v871, %v876
    %880 = vrot.lane.b32.xlu0 %v878, 32
    %v881 = vpop.permute.xlu0 %880
    %v883 = vadd.f32 %v873, %v881
    %v884 = vtanh.pop %v883
    %886 = vrot.lane.b32.xlu0 %v884, 32
    %v887 = vpop.permute.xlu0 %886
    %v889 = vmul.f32 %v871, %v887
    %s890 = scalar_lea.vmem [#allocation3], 32
    %v891 = vld [vmem:[%s890] sm:$0xff]
    %v892 = vsel %vm73, %v786, 0
    %894 = vmatprep.subr.mxu0 0.0
    %895 = vmatpush1.msra.mxu0 %v53
    %896 = vmatprep.subr.mxu0 0.0
    %897 = vmatpush1.msra.mxu0 %v54
    %898 = vmatprep.subr.mxu0 0.0
    %899 = vmatpush1.msra.mxu0 %v55
    %900 = vmatprep.subr.mxu0 0.0
    %901 = vmatpush1.msra.mxu0 %v56
    %902 = vmatprep.subr.mxu0 0.0
    %903 = vmatpush1.msra.mxu0 0.0
    %904 = vmatprep.subr.mxu0 0.0
    %905 = vmatpush1.msra.mxu0 0.0
    %906 = vmatprep.subr.mxu0 0.0
    %907 = vmatpush1.msra.mxu0 0.0
    %908 = vmatprep.subr.mxu0 0.0
    %909 = vmatpush1.msra.mxu0 0.0
    %910 = vmatprep.subr.mxu0 0.0
    %911 = vmatpush1.msra.mxu0 0.0
    %912 = vmatprep.subr.mxu0 0.0
    %913 = vmatpush1.msra.mxu0 0.0
    %914 = vmatprep.subr.mxu0 0.0
    %915 = vmatpush1.msra.mxu0 0.0
    %916 = vmatprep.subr.mxu0 0.0
    %917 = vmatpush1.msra.mxu0 0.0
    %918 = vmatprep.subr.mxu0 0.0
    %919 = vmatpush1.msra.mxu0 0.0
    %920 = vmatprep.subr.mxu0 0.0
    %921 = vmatpush1.msra.mxu0 0.0
    %922 = vmatprep.subr.mxu0 0.0
    %923 = vmatpush1.msra.mxu0 0.0
    %924 = vmatprep.subr.mxu0 0.0
    %925 = vmatpush1.msra.mxu0 0.0
    %926 = vmatprep.subr.mxu0 0.0
    %927 = vmatpush1.msra.mxu0 0.0
    %928 = vmatprep.subr.mxu0 0.0
    %929 = vmatpush1.msra.mxu0 0.0
    %930 = vmatprep.subr.mxu0 0.0
    %931 = vmatpush1.msra.mxu0 0.0
    %932 = vmatprep.subr.mxu0 0.0
    %933 = vmatpush1.msra.mxu0 0.0
    %934 = vmatprep.subr.mxu0 0.0
    %935 = vmatpush1.msra.mxu0 0.0
    %936 = vmatprep.subr.mxu0 0.0
    %937 = vmatpush1.msra.mxu0 0.0
    %938 = vmatprep.subr.mxu0 0.0
    %939 = vmatpush1.msra.mxu0 0.0
    %940 = vmatprep.subr.mxu0 0.0
    %941 = vmatpush1.msra.mxu0 0.0
    %942 = vmatprep.subr.mxu0 0.0
    %943 = vmatpush1.msra.mxu0 0.0
    %944 = vmatprep.subr.mxu0 0.0
    %945 = vmatpush1.msra.mxu0 0.0
    %946 = vmatprep.subr.mxu0 0.0
    %947 = vmatpush1.msra.mxu0 0.0
    %948 = vmatprep.subr.mxu0 0.0
    %949 = vmatpush1.msra.mxu0 0.0
    %950 = vmatprep.subr.mxu0 0.0
    %951 = vmatpush1.msra.mxu0 0.0
    %952 = vmatprep.subr.mxu0 0.0
    %953 = vmatpush1.msra.mxu0 0.0
    %954 = vmatprep.subr.mxu0 0.0
    %955 = vmatpush1.msra.mxu0 0.0
    %956 = vmatprep.subr.mxu0 0.0
    %957 = vmatpush1.msra.mxu0 0.0
    %958 = vmatprep.mubr.f32.mxu0 0.0
    %959 = vmatmul.mubr.f32.gmra.mrb[0].mxu0 %v892
    %v960 = vpop.f32.mrb[0].mxu0
    %v961 = vadd.f32 0.0, %v960
    %v962 = vpop.f32.mrb[0].mxu0
    %963 = vdwg.mxu0
    %v964 = vadd.f32 %v891, %v961
    %v965 = vxor.u32 %v964, 2147483648
    %v966 = vmul.f32 %v965, 1.442695
    %v967 = vpow.pop %v966
    %v968 = vadd.f32 %v967, 1.0
    %v969 = vrcp.pop %v968
    %v970 = vmul.f32 1.0, %v969
    %v971 = vtanh.pop %v964
    %v972 = vmul.f32 %v970, %v777
    %974 = vrot.lane.b32.xlu0 %v971, 32
    %v975 = vpop.permute.xlu0 %974
    %v977 = vmul.f32 %v970, %v975
    %979 = vrot.lane.b32.xlu0 %v977, 32
    %v980 = vpop.permute.xlu0 %979
    %v982 = vadd.f32 %v972, %v980
    %v983 = vtanh.pop %v982
    %985 = vrot.lane.b32.xlu0 %v983, 32
    %v986 = vpop.permute.xlu0 %985
    %v988 = vmul.f32 %v970, %v986
    %990 = vrot.lane.b32.xlu0 %v988, 64
    %v991 = vpop.permute.xlu0 %990
    %994 = vrot.lane.b32.xlu0 %v889, 96
    %v995 = vpop.permute.xlu0 %994
    %v997 = vsel %vm73, %v991, %v995
    %v999 = vsel %vm177, %v997, 0
    %1001 = vmatprep.subr.mxu0 0.0
    %1002 = vmatpush1.msra.mxu0 %v57
    %1003 = vmatprep.subr.mxu0 0.0
    %1004 = vmatpush1.msra.mxu0 %v58
    %1005 = vmatprep.subr.mxu0 0.0
    %1006 = vmatpush1.msra.mxu0 %v59
    %1007 = vmatprep.subr.mxu0 0.0
    %1008 = vmatpush1.msra.mxu0 %v60
    %1009 = vmatprep.subr.mxu0 0.0
    %1010 = vmatpush1.msra.mxu0 %v61
    %1011 = vmatprep.subr.mxu0 0.0
    %1012 = vmatpush1.msra.mxu0 %v62
    %1013 = vmatprep.subr.mxu0 0.0
    %1014 = vmatpush1.msra.mxu0 %v63
    %1015 = vmatprep.subr.mxu0 0.0
    %1016 = vmatpush1.msra.mxu0 %v64
    %1017 = vmatprep.subr.mxu0 0.0
    %1018 = vmatpush1.msra.mxu0 0.0
    %1019 = vmatprep.subr.mxu0 0.0
    %1020 = vmatpush1.msra.mxu0 0.0
    %1021 = vmatprep.subr.mxu0 0.0
    %1022 = vmatpush1.msra.mxu0 0.0
    %1023 = vmatprep.subr.mxu0 0.0
    %1024 = vmatpush1.msra.mxu0 0.0
    %1025 = vmatprep.subr.mxu0 0.0
    %1026 = vmatpush1.msra.mxu0 0.0
    %1027 = vmatprep.subr.mxu0 0.0
    %1028 = vmatpush1.msra.mxu0 0.0
    %1029 = vmatprep.subr.mxu0 0.0
    %1030 = vmatpush1.msra.mxu0 0.0
    %1031 = vmatprep.subr.mxu0 0.0
    %1032 = vmatpush1.msra.mxu0 0.0
    %1033 = vmatprep.subr.mxu0 0.0
    %1034 = vmatpush1.msra.mxu0 0.0
    %1035 = vmatprep.subr.mxu0 0.0
    %1036 = vmatpush1.msra.mxu0 0.0
    %1037 = vmatprep.subr.mxu0 0.0
    %1038 = vmatpush1.msra.mxu0 0.0
    %1039 = vmatprep.subr.mxu0 0.0
    %1040 = vmatpush1.msra.mxu0 0.0
    %1041 = vmatprep.subr.mxu0 0.0
    %1042 = vmatpush1.msra.mxu0 0.0
    %1043 = vmatprep.subr.mxu0 0.0
    %1044 = vmatpush1.msra.mxu0 0.0
    %1045 = vmatprep.subr.mxu0 0.0
    %1046 = vmatpush1.msra.mxu0 0.0
    %1047 = vmatprep.subr.mxu0 0.0
    %1048 = vmatpush1.msra.mxu0 0.0
    %1049 = vmatprep.subr.mxu0 0.0
    %1050 = vmatpush1.msra.mxu0 0.0
    %1051 = vmatprep.subr.mxu0 0.0
    %1052 = vmatpush1.msra.mxu0 0.0
    %1053 = vmatprep.subr.mxu0 0.0
    %1054 = vmatpush1.msra.mxu0 0.0
    %1055 = vmatprep.subr.mxu0 0.0
    %1056 = vmatpush1.msra.mxu0 0.0
    %1057 = vmatprep.subr.mxu0 0.0
    %1058 = vmatpush1.msra.mxu0 0.0
    %1059 = vmatprep.subr.mxu0 0.0
    %1060 = vmatpush1.msra.mxu0 0.0
    %1061 = vmatprep.subr.mxu0 0.0
    %1062 = vmatpush1.msra.mxu0 0.0
    %1063 = vmatprep.subr.mxu0 0.0
    %1064 = vmatpush1.msra.mxu0 0.0
    %1065 = vmatprep.mubr.f32.mxu0 0.0
    %1066 = vmatmul.mubr.f32.gmra.mrb[0].mxu0 %v999
    %v1067 = vpop.f32.mrb[0].mxu0
    %v1068 = vadd.f32 %v70, %v1067
    %v1069 = vpop.f32.mrb[0].mxu0
    %1070 = vdwg.mxu0
    %v1071 = vxor.u32 %v1068, 2147483648
    %v1072 = vmul.f32 %v1071, 1.442695
    %v1073 = vpow.pop %v1072
    %v1074 = vadd.f32 %v1073, 1.0
    %v1075 = vrcp.pop %v1074
    %v1076 = vmul.f32 1.0, %v1075
    %v1077 = vtanh.pop %v1068
    %v1078 = vmul.f32 %v1076, %v883
    %1080 = vrot.lane.b32.xlu0 %v1077, 32
    %v1081 = vpop.permute.xlu0 %1080
    %v1083 = vmul.f32 %v1076, %v1081
    %1085 = vrot.lane.b32.xlu0 %v1083, 32
    %v1086 = vpop.permute.xlu0 %1085
    %v1088 = vadd.f32 %v1078, %v1086
    %v1089 = vtanh.pop %v1088
    %1091 = vrot.lane.b32.xlu0 %v1089, 32
    %v1092 = vpop.permute.xlu0 %1091
    %v1094 = vmul.f32 %v1076, %v1092
    %s1095 = scalar_lea.vmem [#allocation3], 40
    %v1096 = vld [vmem:[%s1095] sm:$0xff]
    %v1097 = vsel %vm73, %v991, 0
    %1099 = vmatprep.subr.mxu0 0.0
    %1100 = vmatpush1.msra.mxu0 %v53
    %1101 = vmatprep.subr.mxu0 0.0
    %1102 = vmatpush1.msra.mxu0 %v54
    %1103 = vmatprep.subr.mxu0 0.0
    %1104 = vmatpush1.msra.mxu0 %v55
    %1105 = vmatprep.subr.mxu0 0.0
    %1106 = vmatpush1.msra.mxu0 %v56
    %1107 = vmatprep.subr.mxu0 0.0
    %1108 = vmatpush1.msra.mxu0 0.0
    %1109 = vmatprep.subr.mxu0 0.0
    %1110 = vmatpush1.msra.mxu0 0.0
    %1111 = vmatprep.subr.mxu0 0.0
    %1112 = vmatpush1.msra.mxu0 0.0
    %1113 = vmatprep.subr.mxu0 0.0
    %1114 = vmatpush1.msra.mxu0 0.0
    %1115 = vmatprep.subr.mxu0 0.0
    %1116 = vmatpush1.msra.mxu0 0.0
    %1117 = vmatprep.subr.mxu0 0.0
    %1118 = vmatpush1.msra.mxu0 0.0
    %1119 = vmatprep.subr.mxu0 0.0
    %1120 = vmatpush1.msra.mxu0 0.0
    %1121 = vmatprep.subr.mxu0 0.0
    %1122 = vmatpush1.msra.mxu0 0.0
    %1123 = vmatprep.subr.mxu0 0.0
    %1124 = vmatpush1.msra.mxu0 0.0
    %1125 = vmatprep.subr.mxu0 0.0
    %1126 = vmatpush1.msra.mxu0 0.0
    %1127 = vmatprep.subr.mxu0 0.0
    %1128 = vmatpush1.msra.mxu0 0.0
    %1129 = vmatprep.subr.mxu0 0.0
    %1130 = vmatpush1.msra.mxu0 0.0
    %1131 = vmatprep.subr.mxu0 0.0
    %1132 = vmatpush1.msra.mxu0 0.0
    %1133 = vmatprep.subr.mxu0 0.0
    %1134 = vmatpush1.msra.mxu0 0.0
    %1135 = vmatprep.subr.mxu0 0.0
    %1136 = vmatpush1.msra.mxu0 0.0
    %1137 = vmatprep.subr.mxu0 0.0
    %1138 = vmatpush1.msra.mxu0 0.0
    %1139 = vmatprep.subr.mxu0 0.0
    %1140 = vmatpush1.msra.mxu0 0.0
    %1141 = vmatprep.subr.mxu0 0.0
    %1142 = vmatpush1.msra.mxu0 0.0
    %1143 = vmatprep.subr.mxu0 0.0
    %1144 = vmatpush1.msra.mxu0 0.0
    %1145 = vmatprep.subr.mxu0 0.0
    %1146 = vmatpush1.msra.mxu0 0.0
    %1147 = vmatprep.subr.mxu0 0.0
    %1148 = vmatpush1.msra.mxu0 0.0
    %1149 = vmatprep.subr.mxu0 0.0
    %1150 = vmatpush1.msra.mxu0 0.0
    %1151 = vmatprep.subr.mxu0 0.0
    %1152 = vmatpush1.msra.mxu0 0.0
    %1153 = vmatprep.subr.mxu0 0.0
    %1154 = vmatpush1.msra.mxu0 0.0
    %1155 = vmatprep.subr.mxu0 0.0
    %1156 = vmatpush1.msra.mxu0 0.0
    %1157 = vmatprep.subr.mxu0 0.0
    %1158 = vmatpush1.msra.mxu0 0.0
    %1159 = vmatprep.subr.mxu0 0.0
    %1160 = vmatpush1.msra.mxu0 0.0
    %1161 = vmatprep.subr.mxu0 0.0
    %1162 = vmatpush1.msra.mxu0 0.0
    %1163 = vmatprep.mubr.f32.mxu0 0.0
    %1164 = vmatmul.mubr.f32.gmra.mrb[0].mxu0 %v1097
    %v1165 = vpop.f32.mrb[0].mxu0
    %v1166 = vadd.f32 0.0, %v1165
    %v1167 = vpop.f32.mrb[0].mxu0
    %1168 = vdwg.mxu0
    %v1169 = vadd.f32 %v1096, %v1166
    %v1170 = vxor.u32 %v1169, 2147483648
    %v1171 = vmul.f32 %v1170, 1.442695
    %v1172 = vpow.pop %v1171
    %v1173 = vadd.f32 %v1172, 1.0
    %v1174 = vrcp.pop %v1173
    %v1175 = vmul.f32 1.0, %v1174
    %v1176 = vtanh.pop %v1169
    %v1177 = vmul.f32 %v1175, %v982
    %1179 = vrot.lane.b32.xlu0 %v1176, 32
    %v1180 = vpop.permute.xlu0 %1179
    %v1182 = vmul.f32 %v1175, %v1180
    %1184 = vrot.lane.b32.xlu0 %v1182, 32
    %v1185 = vpop.permute.xlu0 %1184
    %v1187 = vadd.f32 %v1177, %v1185
    %v1188 = vtanh.pop %v1187
    %1190 = vrot.lane.b32.xlu0 %v1188, 32
    %v1191 = vpop.permute.xlu0 %1190
    %v1193 = vmul.f32 %v1175, %v1191
    %1195 = vrot.lane.b32.xlu0 %v1193, 64
    %v1196 = vpop.permute.xlu0 %1195
    %1199 = vrot.lane.b32.xlu0 %v1094, 96
    %v1200 = vpop.permute.xlu0 %1199
    %v1202 = vsel %vm73, %v1196, %v1200
    %v1204 = vsel %vm177, %v1202, 0
    %1206 = vmatprep.subr.mxu0 0.0
    %1207 = vmatpush1.msra.mxu0 %v57
    %1208 = vmatprep.subr.mxu0 0.0
    %1209 = vmatpush1.msra.mxu0 %v58
    %1210 = vmatprep.subr.mxu0 0.0
    %1211 = vmatpush1.msra.mxu0 %v59
    %1212 = vmatprep.subr.mxu0 0.0
    %1213 = vmatpush1.msra.mxu0 %v60
    %1214 = vmatprep.subr.mxu0 0.0
    %1215 = vmatpush1.msra.mxu0 %v61
    %1216 = vmatprep.subr.mxu0 0.0
    %1217 = vmatpush1.msra.mxu0 %v62
    %1218 = vmatprep.subr.mxu0 0.0
    %1219 = vmatpush1.msra.mxu0 %v63
    %1220 = vmatprep.subr.mxu0 0.0
    %1221 = vmatpush1.msra.mxu0 %v64
    %1222 = vmatprep.subr.mxu0 0.0
    %1223 = vmatpush1.msra.mxu0 0.0
    %1224 = vmatprep.subr.mxu0 0.0
    %1225 = vmatpush1.msra.mxu0 0.0
    %1226 = vmatprep.subr.mxu0 0.0
    %1227 = vmatpush1.msra.mxu0 0.0
    %1228 = vmatprep.subr.mxu0 0.0
    %1229 = vmatpush1.msra.mxu0 0.0
    %1230 = vmatprep.subr.mxu0 0.0
    %1231 = vmatpush1.msra.mxu0 0.0
    %1232 = vmatprep.subr.mxu0 0.0
    %1233 = vmatpush1.msra.mxu0 0.0
    %1234 = vmatprep.subr.mxu0 0.0
    %1235 = vmatpush1.msra.mxu0 0.0
    %1236 = vmatprep.subr.mxu0 0.0
    %1237 = vmatpush1.msra.mxu0 0.0
    %1238 = vmatprep.subr.mxu0 0.0
    %1239 = vmatpush1.msra.mxu0 0.0
    %1240 = vmatprep.subr.mxu0 0.0
    %1241 = vmatpush1.msra.mxu0 0.0
    %1242 = vmatprep.subr.mxu0 0.0
    %1243 = vmatpush1.msra.mxu0 0.0
    %1244 = vmatprep.subr.mxu0 0.0
    %1245 = vmatpush1.msra.mxu0 0.0
    %1246 = vmatprep.subr.mxu0 0.0
    %1247 = vmatpush1.msra.mxu0 0.0
    %1248 = vmatprep.subr.mxu0 0.0
    %1249 = vmatpush1.msra.mxu0 0.0
    %1250 = vmatprep.subr.mxu0 0.0
    %1251 = vmatpush1.msra.mxu0 0.0
    %1252 = vmatprep.subr.mxu0 0.0
    %1253 = vmatpush1.msra.mxu0 0.0
    %1254 = vmatprep.subr.mxu0 0.0
    %1255 = vmatpush1.msra.mxu0 0.0
    %1256 = vmatprep.subr.mxu0 0.0
    %1257 = vmatpush1.msra.mxu0 0.0
    %1258 = vmatprep.subr.mxu0 0.0
    %1259 = vmatpush1.msra.mxu0 0.0
    %1260 = vmatprep.subr.mxu0 0.0
    %1261 = vmatpush1.msra.mxu0 0.0
    %1262 = vmatprep.subr.mxu0 0.0
    %1263 = vmatpush1.msra.mxu0 0.0
    %1264 = vmatprep.subr.mxu0 0.0
    %1265 = vmatpush1.msra.mxu0 0.0
    %1266 = vmatprep.subr.mxu0 0.0
    %1267 = vmatpush1.msra.mxu0 0.0
    %1268 = vmatprep.subr.mxu0 0.0
    %1269 = vmatpush1.msra.mxu0 0.0
    %1270 = vmatprep.mubr.f32.mxu0 0.0
    %1271 = vmatmul.mubr.f32.gmra.mrb[0].mxu0 %v1204
    %v1272 = vpop.f32.mrb[0].mxu0
    %v1273 = vadd.f32 %v70, %v1272
    %v1274 = vpop.f32.mrb[0].mxu0
    %1275 = vdwg.mxu0
    %v1276 = vxor.u32 %v1273, 2147483648
    %v1277 = vmul.f32 %v1276, 1.442695
    %v1278 = vpow.pop %v1277
    %v1279 = vadd.f32 %v1278, 1.0
    %v1280 = vrcp.pop %v1279
    %v1281 = vmul.f32 1.0, %v1280
    %v1282 = vtanh.pop %v1273
    %v1283 = vmul.f32 %v1281, %v1088
    %1285 = vrot.lane.b32.xlu0 %v1282, 32
    %v1286 = vpop.permute.xlu0 %1285
    %v1288 = vmul.f32 %v1281, %v1286
    %1290 = vrot.lane.b32.xlu0 %v1288, 32
    %v1291 = vpop.permute.xlu0 %1290
    %v1293 = vadd.f32 %v1283, %v1291
    %v1294 = vtanh.pop %v1293
    %1296 = vrot.lane.b32.xlu0 %v1294, 32
    %v1297 = vpop.permute.xlu0 %1296
    %v1299 = vmul.f32 %v1281, %v1297
    %s1300 = scalar_lea.vmem [#allocation3], 48
    %v1301 = vld [vmem:[%s1300] sm:$0xff]
    %v1302 = vsel %vm73, %v1196, 0
    %1304 = vmatprep.subr.mxu0 0.0
    %1305 = vmatpush1.msra.mxu0 %v53
    %1306 = vmatprep.subr.mxu0 0.0
    %1307 = vmatpush1.msra.mxu0 %v54
    %1308 = vmatprep.subr.mxu0 0.0
    %1309 = vmatpush1.msra.mxu0 %v55
    %1310 = vmatprep.subr.mxu0 0.0
    %1311 = vmatpush1.msra.mxu0 %v56
    %1312 = vmatprep.subr.mxu0 0.0
    %1313 = vmatpush1.msra.mxu0 0.0
    %1314 = vmatprep.subr.mxu0 0.0
    %1315 = vmatpush1.msra.mxu0 0.0
    %1316 = vmatprep.subr.mxu0 0.0
    %1317 = vmatpush1.msra.mxu0 0.0
    %1318 = vmatprep.subr.mxu0 0.0
    %1319 = vmatpush1.msra.mxu0 0.0
    %1320 = vmatprep.subr.mxu0 0.0
    %1321 = vmatpush1.msra.mxu0 0.0
    %1322 = vmatprep.subr.mxu0 0.0
    %1323 = vmatpush1.msra.mxu0 0.0
    %1324 = vmatprep.subr.mxu0 0.0
    %1325 = vmatpush1.msra.mxu0 0.0
    %1326 = vmatprep.subr.mxu0 0.0
    %1327 = vmatpush1.msra.mxu0 0.0
    %1328 = vmatprep.subr.mxu0 0.0
    %1329 = vmatpush1.msra.mxu0 0.0
    %1330 = vmatprep.subr.mxu0 0.0
    %1331 = vmatpush1.msra.mxu0 0.0
    %1332 = vmatprep.subr.mxu0 0.0
    %1333 = vmatpush1.msra.mxu0 0.0
    %1334 = vmatprep.subr.mxu0 0.0
    %1335 = vmatpush1.msra.mxu0 0.0
    %1336 = vmatprep.subr.mxu0 0.0
    %1337 = vmatpush1.msra.mxu0 0.0
    %1338 = vmatprep.subr.mxu0 0.0
    %1339 = vmatpush1.msra.mxu0 0.0
    %1340 = vmatprep.subr.mxu0 0.0
    %1341 = vmatpush1.msra.mxu0 0.0
    %1342 = vmatprep.subr.mxu0 0.0
    %1343 = vmatpush1.msra.mxu0 0.0
    %1344 = vmatprep.subr.mxu0 0.0
    %1345 = vmatpush1.msra.mxu0 0.0
    %1346 = vmatprep.subr.mxu0 0.0
    %1347 = vmatpush1.msra.mxu0 0.0
    %1348 = vmatprep.subr.mxu0 0.0
    %1349 = vmatpush1.msra.mxu0 0.0
    %1350 = vmatprep.subr.mxu0 0.0
    %1351 = vmatpush1.msra.mxu0 0.0
    %1352 = vmatprep.subr.mxu0 0.0
    %1353 = vmatpush1.msra.mxu0 0.0
    %1354 = vmatprep.subr.mxu0 0.0
    %1355 = vmatpush1.msra.mxu0 0.0
    %1356 = vmatprep.subr.mxu0 0.0
    %1357 = vmatpush1.msra.mxu0 0.0
    %1358 = vmatprep.subr.mxu0 0.0
    %1359 = vmatpush1.msra.mxu0 0.0
    %1360 = vmatprep.subr.mxu0 0.0
    %1361 = vmatpush1.msra.mxu0 0.0
    %1362 = vmatprep.subr.mxu0 0.0
    %1363 = vmatpush1.msra.mxu0 0.0
    %1364 = vmatprep.subr.mxu0 0.0
    %1365 = vmatpush1.msra.mxu0 0.0
    %1366 = vmatprep.subr.mxu0 0.0
    %1367 = vmatpush1.msra.mxu0 0.0
    %1368 = vmatprep.mubr.f32.mxu0 0.0
    %1369 = vmatmul.mubr.f32.gmra.mrb[0].mxu0 %v1302
    %v1370 = vpop.f32.mrb[0].mxu0
    %v1371 = vadd.f32 0.0, %v1370
    %v1372 = vpop.f32.mrb[0].mxu0
    %1373 = vdwg.mxu0
    %v1374 = vadd.f32 %v1301, %v1371
    %v1375 = vxor.u32 %v1374, 2147483648
    %v1376 = vmul.f32 %v1375, 1.442695
    %v1377 = vpow.pop %v1376
    %v1378 = vadd.f32 %v1377, 1.0
    %v1379 = vrcp.pop %v1378
    %v1380 = vmul.f32 1.0, %v1379
    %v1381 = vtanh.pop %v1374
    %v1382 = vmul.f32 %v1380, %v1187
    %1384 = vrot.lane.b32.xlu0 %v1381, 32
    %v1385 = vpop.permute.xlu0 %1384
    %v1387 = vmul.f32 %v1380, %v1385
    %1389 = vrot.lane.b32.xlu0 %v1387, 32
    %v1390 = vpop.permute.xlu0 %1389
    %v1392 = vadd.f32 %v1382, %v1390
    %v1393 = vtanh.pop %v1392
    %1395 = vrot.lane.b32.xlu0 %v1393, 32
    %v1396 = vpop.permute.xlu0 %1395
    %v1398 = vmul.f32 %v1380, %v1396
    %1400 = vrot.lane.b32.xlu0 %v1398, 64
    %v1401 = vpop.permute.xlu0 %1400
    %1404 = vrot.lane.b32.xlu0 %v1299, 96
    %v1405 = vpop.permute.xlu0 %1404
    %v1407 = vsel %vm73, %v1401, %v1405
    %v1409 = vsel %vm177, %v1407, 0
    %1411 = vmatprep.subr.mxu0 0.0
    %1412 = vmatpush1.msra.mxu0 %v57
    %1413 = vmatprep.subr.mxu0 0.0
    %1414 = vmatpush1.msra.mxu0 %v58
    %1415 = vmatprep.subr.mxu0 0.0
    %1416 = vmatpush1.msra.mxu0 %v59
    %1417 = vmatprep.subr.mxu0 0.0
    %1418 = vmatpush1.msra.mxu0 %v60
    %1419 = vmatprep.subr.mxu0 0.0
    %1420 = vmatpush1.msra.mxu0 %v61
    %1421 = vmatprep.subr.mxu0 0.0
    %1422 = vmatpush1.msra.mxu0 %v62
    %1423 = vmatprep.subr.mxu0 0.0
    %1424 = vmatpush1.msra.mxu0 %v63
    %1425 = vmatprep.subr.mxu0 0.0
    %1426 = vmatpush1.msra.mxu0 %v64
    %1427 = vmatprep.subr.mxu0 0.0
    %1428 = vmatpush1.msra.mxu0 0.0
    %1429 = vmatprep.subr.mxu0 0.0
    %1430 = vmatpush1.msra.mxu0 0.0
    %1431 = vmatprep.subr.mxu0 0.0
    %1432 = vmatpush1.msra.mxu0 0.0
    %1433 = vmatprep.subr.mxu0 0.0
    %1434 = vmatpush1.msra.mxu0 0.0
    %1435 = vmatprep.subr.mxu0 0.0
    %1436 = vmatpush1.msra.mxu0 0.0
    %1437 = vmatprep.subr.mxu0 0.0
    %1438 = vmatpush1.msra.mxu0 0.0
    %1439 = vmatprep.subr.mxu0 0.0
    %1440 = vmatpush1.msra.mxu0 0.0
    %1441 = vmatprep.subr.mxu0 0.0
    %1442 = vmatpush1.msra.mxu0 0.0
    %1443 = vmatprep.subr.mxu0 0.0
    %1444 = vmatpush1.msra.mxu0 0.0
    %1445 = vmatprep.subr.mxu0 0.0
    %1446 = vmatpush1.msra.mxu0 0.0
    %1447 = vmatprep.subr.mxu0 0.0
    %1448 = vmatpush1.msra.mxu0 0.0
    %1449 = vmatprep.subr.mxu0 0.0
    %1450 = vmatpush1.msra.mxu0 0.0
    %1451 = vmatprep.subr.mxu0 0.0
    %1452 = vmatpush1.msra.mxu0 0.0
    %1453 = vmatprep.subr.mxu0 0.0
    %1454 = vmatpush1.msra.mxu0 0.0
    %1455 = vmatprep.subr.mxu0 0.0
    %1456 = vmatpush1.msra.mxu0 0.0
    %1457 = vmatprep.subr.mxu0 0.0
    %1458 = vmatpush1.msra.mxu0 0.0
    %1459 = vmatprep.subr.mxu0 0.0
    %1460 = vmatpush1.msra.mxu0 0.0
    %1461 = vmatprep.subr.mxu0 0.0
    %1462 = vmatpush1.msra.mxu0 0.0
    %1463 = vmatprep.subr.mxu0 0.0
    %1464 = vmatpush1.msra.mxu0 0.0
    %1465 = vmatprep.subr.mxu0 0.0
    %1466 = vmatpush1.msra.mxu0 0.0
    %1467 = vmatprep.subr.mxu0 0.0
    %1468 = vmatpush1.msra.mxu0 0.0
    %1469 = vmatprep.subr.mxu0 0.0
    %1470 = vmatpush1.msra.mxu0 0.0
    %1471 = vmatprep.subr.mxu0 0.0
    %1472 = vmatpush1.msra.mxu0 0.0
    %1473 = vmatprep.subr.mxu0 0.0
    %1474 = vmatpush1.msra.mxu0 0.0
    %1475 = vmatprep.mubr.f32.mxu0 0.0
    %1476 = vmatmul.mubr.f32.gmra.mrb[0].mxu0 %v1409
    %v1477 = vpop.f32.mrb[0].mxu0
    %v1478 = vadd.f32 %v70, %v1477
    %v1479 = vpop.f32.mrb[0].mxu0
    %1480 = vdwg.mxu0
    %v1481 = vxor.u32 %v1478, 2147483648
    %v1482 = vmul.f32 %v1481, 1.442695
    %v1483 = vpow.pop %v1482
    %v1484 = vadd.f32 %v1483, 1.0
    %v1485 = vrcp.pop %v1484
    %v1486 = vmul.f32 1.0, %v1485
    %v1487 = vtanh.pop %v1478
    %v1488 = vmul.f32 %v1486, %v1293
    %1490 = vrot.lane.b32.xlu0 %v1487, 32
    %v1491 = vpop.permute.xlu0 %1490
    %v1493 = vmul.f32 %v1486, %v1491
    %1495 = vrot.lane.b32.xlu0 %v1493, 32
    %v1496 = vpop.permute.xlu0 %1495
    %v1498 = vadd.f32 %v1488, %v1496
    %v1499 = vtanh.pop %v1498
    %1501 = vrot.lane.b32.xlu0 %v1499, 32
    %v1502 = vpop.permute.xlu0 %1501
    %v1504 = vmul.f32 %v1486, %v1502
    %s1505 = scalar_lea.vmem [#allocation3], 56
    %v1506 = vld [vmem:[%s1505] sm:$0xff]
    %v1507 = vsel %vm73, %v1401, 0
    %1509 = vmatprep.subr.mxu0 0.0
    %1510 = vmatpush1.msra.mxu0 %v53
    %1511 = vmatprep.subr.mxu0 0.0
    %1512 = vmatpush1.msra.mxu0 %v54
    %1513 = vmatprep.subr.mxu0 0.0
    %1514 = vmatpush1.msra.mxu0 %v55
    %1515 = vmatprep.subr.mxu0 0.0
    %1516 = vmatpush1.msra.mxu0 %v56
    %1517 = vmatprep.subr.mxu0 0.0
    %1518 = vmatpush1.msra.mxu0 0.0
    %1519 = vmatprep.subr.mxu0 0.0
    %1520 = vmatpush1.msra.mxu0 0.0
    %1521 = vmatprep.subr.mxu0 0.0
    %1522 = vmatpush1.msra.mxu0 0.0
    %1523 = vmatprep.subr.mxu0 0.0
    %1524 = vmatpush1.msra.mxu0 0.0
    %1525 = vmatprep.subr.mxu0 0.0
    %1526 = vmatpush1.msra.mxu0 0.0
    %1527 = vmatprep.subr.mxu0 0.0
    %1528 = vmatpush1.msra.mxu0 0.0
    %1529 = vmatprep.subr.mxu0 0.0
    %1530 = vmatpush1.msra.mxu0 0.0
    %1531 = vmatprep.subr.mxu0 0.0
    %1532 = vmatpush1.msra.mxu0 0.0
    %1533 = vmatprep.subr.mxu0 0.0
    %1534 = vmatpush1.msra.mxu0 0.0
    %1535 = vmatprep.subr.mxu0 0.0
    %1536 = vmatpush1.msra.mxu0 0.0
    %1537 = vmatprep.subr.mxu0 0.0
    %1538 = vmatpush1.msra.mxu0 0.0
    %1539 = vmatprep.subr.mxu0 0.0
    %1540 = vmatpush1.msra.mxu0 0.0
    %1541 = vmatprep.subr.mxu0 0.0
    %1542 = vmatpush1.msra.mxu0 0.0
    %1543 = vmatprep.subr.mxu0 0.0
    %1544 = vmatpush1.msra.mxu0 0.0
    %1545 = vmatprep.subr.mxu0 0.0
    %1546 = vmatpush1.msra.mxu0 0.0
    %1547 = vmatprep.subr.mxu0 0.0
    %1548 = vmatpush1.msra.mxu0 0.0
    %1549 = vmatprep.subr.mxu0 0.0
    %1550 = vmatpush1.msra.mxu0 0.0
    %1551 = vmatprep.subr.mxu0 0.0
    %1552 = vmatpush1.msra.mxu0 0.0
    %1553 = vmatprep.subr.mxu0 0.0
    %1554 = vmatpush1.msra.mxu0 0.0
    %1555 = vmatprep.subr.mxu0 0.0
    %1556 = vmatpush1.msra.mxu0 0.0
    %1557 = vmatprep.subr.mxu0 0.0
    %1558 = vmatpush1.msra.mxu0 0.0
    %1559 = vmatprep.subr.mxu0 0.0
    %1560 = vmatpush1.msra.mxu0 0.0
    %1561 = vmatprep.subr.mxu0 0.0
    %1562 = vmatpush1.msra.mxu0 0.0
    %1563 = vmatprep.subr.mxu0 0.0
    %1564 = vmatpush1.msra.mxu0 0.0
    %1565 = vmatprep.subr.mxu0 0.0
    %1566 = vmatpush1.msra.mxu0 0.0
    %1567 = vmatprep.subr.mxu0 0.0
    %1568 = vmatpush1.msra.mxu0 0.0
    %1569 = vmatprep.subr.mxu0 0.0
    %1570 = vmatpush1.msra.mxu0 0.0
    %1571 = vmatprep.subr.mxu0 0.0
    %1572 = vmatpush1.msra.mxu0 0.0
    %1573 = vmatprep.mubr.f32.mxu0 0.0
    %1574 = vmatmul.mubr.f32.gmra.mrb[0].mxu0 %v1507
    %v1575 = vpop.f32.mrb[0].mxu0
    %v1576 = vadd.f32 0.0, %v1575
    %v1577 = vpop.f32.mrb[0].mxu0
    %1578 = vdwg.mxu0
    %v1579 = vadd.f32 %v1506, %v1576
    %v1580 = vxor.u32 %v1579, 2147483648
    %v1581 = vmul.f32 %v1580, 1.442695
    %v1582 = vpow.pop %v1581
    %v1583 = vadd.f32 %v1582, 1.0
    %v1584 = vrcp.pop %v1583
    %v1585 = vmul.f32 1.0, %v1584
    %v1586 = vtanh.pop %v1579
    %v1587 = vmul.f32 %v1585, %v1392
    %1589 = vrot.lane.b32.xlu0 %v1586, 32
    %v1590 = vpop.permute.xlu0 %1589
    %v1592 = vmul.f32 %v1585, %v1590
    %1594 = vrot.lane.b32.xlu0 %v1592, 32
    %v1595 = vpop.permute.xlu0 %1594
    %v1597 = vadd.f32 %v1587, %v1595
    %v1598 = vtanh.pop %v1597
    %1600 = vrot.lane.b32.xlu0 %v1598, 32
    %v1601 = vpop.permute.xlu0 %1600
    %v1603 = vmul.f32 %v1585, %v1601
    %1605 = vrot.lane.b32.xlu0 %v1603, 64
    %v1606 = vpop.permute.xlu0 %1605
    %1609 = vrot.lane.b32.xlu0 %v1504, 96
    %v1610 = vpop.permute.xlu0 %1609
    %v1612 = vsel %vm73, %v1606, %v1610
    %v1614 = vsel %vm177, %v1612, 0
    %1616 = vmatprep.subr.mxu0 0.0
    %1617 = vmatpush1.msra.mxu0 %v57
    %1618 = vmatprep.subr.mxu0 0.0
    %1619 = vmatpush1.msra.mxu0 %v58
    %1620 = vmatprep.subr.mxu0 0.0
    %1621 = vmatpush1.msra.mxu0 %v59
    %1622 = vmatprep.subr.mxu0 0.0
    %1623 = vmatpush1.msra.mxu0 %v60
    %1624 = vmatprep.subr.mxu0 0.0
    %1625 = vmatpush1.msra.mxu0 %v61
    %1626 = vmatprep.subr.mxu0 0.0
    %1627 = vmatpush1.msra.mxu0 %v62
    %1628 = vmatprep.subr.mxu0 0.0
    %1629 = vmatpush1.msra.mxu0 %v63
    %1630 = vmatprep.subr.mxu0 0.0
    %1631 = vmatpush1.msra.mxu0 %v64
    %1632 = vmatprep.subr.mxu0 0.0
    %1633 = vmatpush1.msra.mxu0 0.0
    %1634 = vmatprep.subr.mxu0 0.0
    %1635 = vmatpush1.msra.mxu0 0.0
    %1636 = vmatprep.subr.mxu0 0.0
    %1637 = vmatpush1.msra.mxu0 0.0
    %1638 = vmatprep.subr.mxu0 0.0
    %1639 = vmatpush1.msra.mxu0 0.0
    %1640 = vmatprep.subr.mxu0 0.0
    %1641 = vmatpush1.msra.mxu0 0.0
    %1642 = vmatprep.subr.mxu0 0.0
    %1643 = vmatpush1.msra.mxu0 0.0
    %1644 = vmatprep.subr.mxu0 0.0
    %1645 = vmatpush1.msra.mxu0 0.0
    %1646 = vmatprep.subr.mxu0 0.0
    %1647 = vmatpush1.msra.mxu0 0.0
    %1648 = vmatprep.subr.mxu0 0.0
    %1649 = vmatpush1.msra.mxu0 0.0
    %1650 = vmatprep.subr.mxu0 0.0
    %1651 = vmatpush1.msra.mxu0 0.0
    %1652 = vmatprep.subr.mxu0 0.0
    %1653 = vmatpush1.msra.mxu0 0.0
    %1654 = vmatprep.subr.mxu0 0.0
    %1655 = vmatpush1.msra.mxu0 0.0
    %1656 = vmatprep.subr.mxu0 0.0
    %1657 = vmatpush1.msra.mxu0 0.0
    %1658 = vmatprep.subr.mxu0 0.0
    %1659 = vmatpush1.msra.mxu0 0.0
    %1660 = vmatprep.subr.mxu0 0.0
    %1661 = vmatpush1.msra.mxu0 0.0
    %1662 = vmatprep.subr.mxu0 0.0
    %1663 = vmatpush1.msra.mxu0 0.0
    %1664 = vmatprep.subr.mxu0 0.0
    %1665 = vmatpush1.msra.mxu0 0.0
    %1666 = vmatprep.subr.mxu0 0.0
    %1667 = vmatpush1.msra.mxu0 0.0
    %1668 = vmatprep.subr.mxu0 0.0
    %1669 = vmatpush1.msra.mxu0 0.0
    %1670 = vmatprep.subr.mxu0 0.0
    %1671 = vmatpush1.msra.mxu0 0.0
    %1672 = vmatprep.subr.mxu0 0.0
    %1673 = vmatpush1.msra.mxu0 0.0
    %1674 = vmatprep.subr.mxu0 0.0
    %1675 = vmatpush1.msra.mxu0 0.0
    %1676 = vmatprep.subr.mxu0 0.0
    %1677 = vmatpush1.msra.mxu0 0.0
    %1678 = vmatprep.subr.mxu0 0.0
    %1679 = vmatpush1.msra.mxu0 0.0
    %1680 = vmatprep.mubr.f32.mxu0 0.0
    %1681 = vmatmul.mubr.f32.gmra.mrb[0].mxu0 %v1614
    %v1682 = vpop.f32.mrb[0].mxu0
    %v1683 = vadd.f32 %v70, %v1682
    %v1684 = vpop.f32.mrb[0].mxu0
    %1685 = vdwg.mxu0
    %v1686 = vxor.u32 %v1683, 2147483648
    %v1687 = vmul.f32 %v1686, 1.442695
    %v1688 = vpow.pop %v1687
    %v1689 = vadd.f32 %v1688, 1.0
    %v1690 = vrcp.pop %v1689
    %v1691 = vmul.f32 1.0, %v1690
    %v1692 = vtanh.pop %v1683
    %v1693 = vmul.f32 %v1691, %v1498
    %1695 = vrot.lane.b32.xlu0 %v1692, 32
    %v1696 = vpop.permute.xlu0 %1695
    %v1698 = vmul.f32 %v1691, %v1696
    %1700 = vrot.lane.b32.xlu0 %v1698, 32
    %v1701 = vpop.permute.xlu0 %1700
    %v1703 = vadd.f32 %v1693, %v1701
    %v1704 = vtanh.pop %v1703
    %1706 = vrot.lane.b32.xlu0 %v1704, 32
    %v1707 = vpop.permute.xlu0 %1706
    %v1709 = vmul.f32 %v1691, %v1707
    %v1710 = vld [vmem:[%s4] sm:$0xff]
    %v1711 = vld [vmem:[%s4 + $0x8] sm:$0xff]
    %v1712 = vld [vmem:[%s4 + $0x10] sm:$0xff]
    %v1713 = vld [vmem:[%s4 + $0x18] sm:$0xff]
    %v1714 = vld [vmem:[#allocation2] sm:$0x1]
    %v1716 = vlaneseq
    %v1717 = vshrl.u32 %v1716, 7
    %v1718 = vsub.s32 0, %v1717
    %v1719 = vrot.slane %v1714, %v1718
    %1722 = vrot.lane.b32.xlu0 %v1709, 64
    %v1723 = vpop.permute.xlu0 %1722
    %v1724 = vsel %vm73, %v1723, 0
    %1726 = vmatprep.subr.mxu0 0.0
    %1727 = vmatpush1.msra.mxu0 %v1710
    %1728 = vmatprep.subr.mxu0 0.0
    %1729 = vmatpush1.msra.mxu0 %v1711
    %1730 = vmatprep.subr.mxu0 0.0
    %1731 = vmatpush1.msra.mxu0 %v1712
    %1732 = vmatprep.subr.mxu0 0.0
    %1733 = vmatpush1.msra.mxu0 %v1713
    %1734 = vmatprep.subr.mxu0 0.0
    %1735 = vmatpush1.msra.mxu0 0.0
    %1736 = vmatprep.subr.mxu0 0.0
    %1737 = vmatpush1.msra.mxu0 0.0
    %1738 = vmatprep.subr.mxu0 0.0
    %1739 = vmatpush1.msra.mxu0 0.0
    %1740 = vmatprep.subr.mxu0 0.0
    %1741 = vmatpush1.msra.mxu0 0.0
    %1742 = vmatprep.subr.mxu0 0.0
    %1743 = vmatpush1.msra.mxu0 0.0
    %1744 = vmatprep.subr.mxu0 0.0
    %1745 = vmatpush1.msra.mxu0 0.0
    %1746 = vmatprep.subr.mxu0 0.0
    %1747 = vmatpush1.msra.mxu0 0.0
    %1748 = vmatprep.subr.mxu0 0.0
    %1749 = vmatpush1.msra.mxu0 0.0
    %1750 = vmatprep.subr.mxu0 0.0
    %1751 = vmatpush1.msra.mxu0 0.0
    %1752 = vmatprep.subr.mxu0 0.0
    %1753 = vmatpush1.msra.mxu0 0.0
    %1754 = vmatprep.subr.mxu0 0.0
    %1755 = vmatpush1.msra.mxu0 0.0
    %1756 = vmatprep.subr.mxu0 0.0
    %1757 = vmatpush1.msra.mxu0 0.0
    %1758 = vmatprep.subr.mxu0 0.0
    %1759 = vmatpush1.msra.mxu0 0.0
    %1760 = vmatprep.subr.mxu0 0.0
    %1761 = vmatpush1.msra.mxu0 0.0
    %1762 = vmatprep.subr.mxu0 0.0
    %1763 = vmatpush1.msra.mxu0 0.0
    %1764 = vmatprep.subr.mxu0 0.0
    %1765 = vmatpush1.msra.mxu0 0.0
    %1766 = vmatprep.subr.mxu0 0.0
    %1767 = vmatpush1.msra.mxu0 0.0
    %1768 = vmatprep.subr.mxu0 0.0
    %1769 = vmatpush1.msra.mxu0 0.0
    %1770 = vmatprep.subr.mxu0 0.0
    %1771 = vmatpush1.msra.mxu0 0.0
    %1772 = vmatprep.subr.mxu0 0.0
    %1773 = vmatpush1.msra.mxu0 0.0
    %1774 = vmatprep.subr.mxu0 0.0
    %1775 = vmatpush1.msra.mxu0 0.0
    %1776 = vmatprep.subr.mxu0 0.0
    %1777 = vmatpush1.msra.mxu0 0.0
    %1778 = vmatprep.subr.mxu0 0.0
    %1779 = vmatpush1.msra.mxu0 0.0
    %1780 = vmatprep.subr.mxu0 0.0
    %1781 = vmatpush1.msra.mxu0 0.0
    %1782 = vmatprep.subr.mxu0 0.0
    %1783 = vmatpush1.msra.mxu0 0.0
    %1784 = vmatprep.subr.mxu0 0.0
    %1785 = vmatpush1.msra.mxu0 0.0
    %1786 = vmatprep.subr.mxu0 0.0
    %1787 = vmatpush1.msra.mxu0 0.0
    %1788 = vmatprep.subr.mxu0 0.0
    %1789 = vmatpush1.msra.mxu0 0.0
    %1790 = vmatprep.mubr.f32.mxu0 0.0
    %1791 = vmatmul.mubr.f32.gmra.mrb[0].mxu0 %v1724
    %v1792 = vpop.f32.mrb[0].mxu0
    %v1793 = vadd.f32 %v1719, %v1792
    %v1794 = vpop.f32.mrb[0].mxu0
    %1795 = vdwg.mxu0
    %vm1796 = vcmask 7168
    %1797 = vst.msk [vmem:[%s6] sm:$0xff] %vm1796, %v1793
    // Predicated region
    $region34: #{tpu_custom_call.1} parent=1 // pred_check
      _
    $region35: #{tpu_custom_call.1} parent=1 // pred_check_branch
      %1799 = sbr.rel (0) target = $region37
    $region36: #{tpu_custom_call.1} parent=1 // pred_region
      _
    $region37: #{tpu_custom_call.1} parent=1 // pred_fallthru
      _
    // Predicated region
    $region38: #{tpu_custom_call.1} parent=1 // pred_check
      _
    $region39: #{tpu_custom_call.1} parent=1 // pred_check_branch
      %1801 = sbr.rel (0) target = $region41
    $region40: #{tpu_custom_call.1} parent=1 // pred_region
      _
    $region41: #{tpu_custom_call.1} parent=1 // pred_fallthru
      _
    %1802 = vsyncpa [#allocation4], 1
    %1803 = vsyncpa [#allocation6], 1

</llo_original>
